<compile_context>
chip_gen: v7x
topology: tpu7x:2x2x1
jax: 0.10.0
libtpu: 0.0.40
codegen_flags: <defaults>
</compile_context>

<pallas_src>
import jax
import jax.numpy as jnp
from jax.experimental import pallas as pl
from jax.experimental.pallas import tpu as pltpu

F_IN = 1612
H1 = 200
H2 = 100
F_OUT = 1
BN_EPS = 1e-5

# Padded (lane / MXU aligned) sizes.
F_IN_PAD = 1664   # 13 * 128
H1_PAD = 256
H2_PAD = 128

BLOCK_B = 512     # batch tile per grid step


def _round_up(n, m):
    return ((n + m - 1) // m) * m


def _mlp_kernel(x_ref, w1_ref, b1_ref, w2_ref, b2_ref, w3_ref, b3_ref, o_ref):
    # fc1 (+ folded bn0) + relu  -- bf16 MXU matmul, f32 accumulation.
    x = x_ref[...].astype(jnp.bfloat16)
    h1 = jnp.dot(x, w1_ref[...], preferred_element_type=jnp.float32) + b1_ref[...]
    h1 = jnp.maximum(h1, 0.0)

    # fc2 (+ folded bn1) + relu.
    h2 = jnp.dot(h1.astype(jnp.bfloat16), w2_ref[...],
                 preferred_element_type=jnp.float32) + b2_ref[...]
    h2 = jnp.maximum(h2, 0.0)

    # layer_out (+ folded bn_out): N=1 output -> VPU multiply + lane reduction.
    o_ref[...] = jnp.sum(h2 * w3_ref[...], axis=-1, keepdims=True) + b3_ref[...]


@jax.jit
def my_classifier_forward(x, kernel_params):
    """x: [B, 1612] float32 -> logits [B, 1] float32 (eval-mode forward)."""
    w1, b1, w2, b2, w3_row, b3 = kernel_params
    B = x.shape[0]

    TB = min(BLOCK_B, _round_up(B, 8))
    Bp = _round_up(B, TB)

    # Pad batch to a multiple of TB and features to the lane-aligned width.
    x_pad = jnp.pad(x, ((0, Bp - B), (0, F_IN_PAD - F_IN)))

    out = pl.pallas_call(
        _mlp_kernel,
        out_shape=jax.ShapeDtypeStruct((Bp, F_OUT), jnp.float32),
        grid=(Bp // TB,),
        in_specs=[
            pl.BlockSpec((TB, F_IN_PAD), lambda i: (i, 0)),       # x tile (pipelined)
            pl.BlockSpec((F_IN_PAD, H1_PAD), lambda i: (0, 0)),   # w1 (VMEM-resident)
            pl.BlockSpec((1, H1_PAD), lambda i: (0, 0)),          # b1
            pl.BlockSpec((H1_PAD, H2_PAD), lambda i: (0, 0)),     # w2 (VMEM-resident)
            pl.BlockSpec((1, H2_PAD), lambda i: (0, 0)),          # b2
            pl.BlockSpec((1, H2_PAD), lambda i: (0, 0)),          # w3 row (VMEM-resident)
            pl.BlockSpec((1, 1), lambda i: (0, 0)),               # b3
        ],
        out_specs=pl.BlockSpec((TB, F_OUT), lambda i: (i, 0)),
        compiler_params=pltpu.CompilerParams(
            dimension_semantics=("parallel",),
            vmem_limit_bytes=32 << 20,
        ),
    )(x_pad, w1, b1, w2, b2, w3_row, b3)

    return out[:B]


def init_torch_params(key):
    """PyTorch-default init: Linear U(-1/sqrt(fan_in), +1/sqrt(fan_in)), BN defaults."""
    def linear_init(k, fan_in, fan_out):
        kw, kb = jax.random.split(k)
        bound = 1.0 / float(fan_in) ** 0.5
        w = jax.random.uniform(kw, (fan_in, fan_out), jnp.float32, -bound, bound)
        b = jax.random.uniform(kb, (fan_out,), jnp.float32, -bound, bound)
        return w, b

    def bn_init(n):
        # (gamma, beta, running_mean, running_var) -- PyTorch defaults.
        return (jnp.ones((n,), jnp.float32), jnp.zeros((n,), jnp.float32),
                jnp.zeros((n,), jnp.float32), jnp.ones((n,), jnp.float32))

    k1, k2, k3 = jax.random.split(key, 3)
    w1, b1 = linear_init(k1, F_IN, H1)
    w2, b2 = linear_init(k2, H1, H2)
    w3, b3 = linear_init(k3, H2, F_OUT)
    return dict(w1=w1, b1=b1, w2=w2, b2=b2, w3=w3, b3=b3,
                bn0=bn_init(F_IN), bn1=bn_init(H1), bn2=bn_init(H2))


def fold_and_pad_params(p):
    """Fold eval-mode BN affines into the adjacent Linears, pad to aligned shapes,
    cast the two large weight matrices to bf16."""
    def bn_affine(bn):
        gamma, beta, mean, var = bn
        scale = gamma / jnp.sqrt(var + BN_EPS)
        shift = beta - mean * scale
        return scale, shift

    s0, t0 = bn_affine(p["bn0"])
    s1, t1 = bn_affine(p["bn1"])
    s2, t2 = bn_affine(p["bn2"])

    # ((x*s + t) @ W + b)  ==  x @ (s[:,None]*W) + (t @ W + b)   (exact in eval mode)
    w1f = s0[:, None] * p["w1"]
    b1f = t0 @ p["w1"] + p["b1"]
    w2f = s1[:, None] * p["w2"]
    b2f = t1 @ p["w2"] + p["b2"]
    w3f = s2[:, None] * p["w3"]          # [H2, 1]
    b3f = t2 @ p["w3"] + p["b3"]         # [1]

    w1p = jnp.zeros((F_IN_PAD, H1_PAD), jnp.float32).at[:F_IN, :H1].set(w1f)
    b1p = jnp.zeros((1, H1_PAD), jnp.float32).at[0, :H1].set(b1f)
    w2p = jnp.zeros((H1_PAD, H2_PAD), jnp.float32).at[:H1, :H2].set(w2f)
    b2p = jnp.zeros((1, H2_PAD), jnp.float32).at[0, :H2].set(b2f)
    w3p = jnp.zeros((1, H2_PAD), jnp.float32).at[0, :H2].set(w3f[:, 0])
    b3p = b3f.reshape(1, 1).astype(jnp.float32)

    return (w1p.astype(jnp.bfloat16), b1p,
            w2p.astype(jnp.bfloat16), b2p,
            w3p, b3p)


def reference_forward_f32(x, p):
    """Pure-JAX fp32 reference following the PyTorch eval-mode forward exactly."""
    def bn(h, params):
        gamma, beta, mean, var = params
        return (h - mean) / jnp.sqrt(var + BN_EPS) * gamma + beta
    h = bn(x, p["bn0"])
    h = jnp.maximum(h @ p["w1"] + p["b1"], 0.0)   # dropout == identity at eval
    h = bn(h, p["bn1"])
    h = jnp.maximum(h @ p["w2"] + p["b2"], 0.0)   # dropout == identity at eval
    h = bn(h, p["bn2"])
    return h @ p["w3"] + p["b3"]


def reference_forward_kernel_path(x, kernel_params):
    """Pure-JAX reference mirroring the kernel numerics (folded BN, padded shapes,
    bf16 matmul inputs with f32 accumulation)."""
    w1, b1, w2, b2, w3_row, b3 = kernel_params
    xp = jnp.pad(x, ((0, 0), (0, F_IN_PAD - F_IN)))
    h1 = jnp.maximum(jnp.dot(xp.astype(jnp.bfloat16), w1,
                             preferred_element_type=jnp.float32) + b1, 0.0)
    h2 = jnp.maximum(jnp.dot(h1.astype(jnp.bfloat16), w2,
                             preferred_element_type=jnp.float32) + b2, 0.0)
    return jnp.sum(h2 * w3_row, axis=-1, keepdims=True) + b3


if __name__ == "__main__":
    B = 8  # small batch for the self-test
    key = jax.random.PRNGKey(0)
    kx, kparams = jax.random.split(key)
    x = jax.random.normal(kx, (B, F_IN), jnp.float32)

    torch_params = init_torch_params(kparams)
    kernel_params = fold_and_pad_params(torch_params)

    out = my_classifier_forward(x, kernel_params)
    out = jax.block_until_ready(out)
    assert out.shape == (B, F_OUT), out.shape

    # Tight check vs. a reference that matches the kernel's numerics (bf16 MXU inputs).
    ref_bf16 = reference_forward_kernel_path(x, kernel_params)
    assert jnp.allclose(out, ref_bf16, atol=2e-3, rtol=2e-3), "mismatch vs bf16-path reference"

    # Looser check vs. the full-precision PyTorch-style eval forward.
    ref_f32 = reference_forward_f32(x, torch_params)
    assert jnp.allclose(out, ref_f32, atol=2e-1, rtol=5e-2), "mismatch vs fp32 reference"

    print("KERNEL_OK")
</pallas_src>

<mosaic_0001>
module attributes {stable_mosaic.version = 11 : i64} {
  func.func @_mlp_kernel(%arg0: i32, %arg1: memref<8x1664xf32, #tpu.memory_space<vmem>>, %arg2: memref<1664x256xbf16, #tpu.memory_space<vmem>>, %arg3: memref<1x256xf32, #tpu.memory_space<vmem>>, %arg4: memref<256x128xbf16, #tpu.memory_space<vmem>>, %arg5: memref<1x128xf32, #tpu.memory_space<vmem>>, %arg6: memref<1x128xf32, #tpu.memory_space<vmem>>, %arg7: memref<1x1xf32, #tpu.memory_space<vmem>>, %arg8: memref<8x1xf32, #tpu.memory_space<vmem>>) attributes {dimension_semantics = [#tpu.dimension_semantics<parallel>], iteration_bounds = array<i64: 1>, scalar_prefetch = 0 : i64, scratch_operands = 0 : i64, tpu.core_type = #tpu.core_type<tc>, window_params = [{transform_indices = @transform_0, window_bounds = array<i64: 8, 1664>}, {pipeline_mode = #tpu.pipeline_mode<synchronous>, transform_indices = @transform_1, window_bounds = array<i64: 1664, 256>}, {pipeline_mode = #tpu.pipeline_mode<synchronous>, transform_indices = @transform_2, window_bounds = array<i64: 1, 256>}, {pipeline_mode = #tpu.pipeline_mode<synchronous>, transform_indices = @transform_3, window_bounds = array<i64: 256, 128>}, {pipeline_mode = #tpu.pipeline_mode<synchronous>, transform_indices = @transform_4, window_bounds = array<i64: 1, 128>}, {pipeline_mode = #tpu.pipeline_mode<synchronous>, transform_indices = @transform_5, window_bounds = array<i64: 1, 128>}, {pipeline_mode = #tpu.pipeline_mode<synchronous>, transform_indices = @transform_6, window_bounds = array<i64: 1, 1>}, {transform_indices = @transform_7, window_bounds = array<i64: 8, 1>}]} {
    %c0 = arith.constant 0 : index
    %c0_0 = arith.constant 0 : index
    %0 = vector.load %arg1[%c0, %c0_0] : memref<8x1664xf32, #tpu.memory_space<vmem>>, vector<8x1664xf32>
    %1 = arith.truncf %0 : vector<8x1664xf32> to vector<8x1664xbf16>
    %c0_1 = arith.constant 0 : index
    %c0_2 = arith.constant 0 : index
    %2 = vector.load %arg2[%c0_1, %c0_2] : memref<1664x256xbf16, #tpu.memory_space<vmem>>, vector<1664x256xbf16>
    %cst = arith.constant dense<0.000000e+00> : vector<8x256xf32>
    %3 = tpu.matmul %1, %2, %cst {dimension_numbers = #tpu.dot_dimension_numbers<[1], [0], [0], [1], [0, 0, 1, 1], [], []>} : vector<8x1664xbf16>, vector<1664x256xbf16>, vector<8x256xf32> -> vector<8x256xf32>
    %c0_3 = arith.constant 0 : index
    %c0_4 = arith.constant 0 : index
    %4 = vector.load %arg3[%c0_3, %c0_4] : memref<1x256xf32, #tpu.memory_space<vmem>>, vector<1x256xf32>
    %5 = vector.broadcast %4 : vector<1x256xf32> to vector<8x256xf32>
    %6 = arith.addf %3, %5 : vector<8x256xf32>
    %cst_5 = arith.constant 0.000000e+00 : f32
    %7 = vector.broadcast %cst_5 : f32 to vector<8x256xf32>
    %8 = arith.maximumf %6, %7 : vector<8x256xf32>
    %9 = arith.truncf %8 : vector<8x256xf32> to vector<8x256xbf16>
    %c0_6 = arith.constant 0 : index
    %c0_7 = arith.constant 0 : index
    %10 = vector.load %arg4[%c0_6, %c0_7] : memref<256x128xbf16, #tpu.memory_space<vmem>>, vector<256x128xbf16>
    %cst_8 = arith.constant dense<0.000000e+00> : vector<8x128xf32>
    %11 = tpu.matmul %9, %10, %cst_8 {dimension_numbers = #tpu.dot_dimension_numbers<[1], [0], [0], [1], [0, 0, 1, 1], [], []>} : vector<8x256xbf16>, vector<256x128xbf16>, vector<8x128xf32> -> vector<8x128xf32>
    %c0_9 = arith.constant 0 : index
    %c0_10 = arith.constant 0 : index
    %12 = vector.load %arg5[%c0_9, %c0_10] : memref<1x128xf32, #tpu.memory_space<vmem>>, vector<1x128xf32>
    %13 = vector.broadcast %12 : vector<1x128xf32> to vector<8x128xf32>
    %14 = arith.addf %11, %13 : vector<8x128xf32>
    %cst_11 = arith.constant 0.000000e+00 : f32
    %15 = vector.broadcast %cst_11 : f32 to vector<8x128xf32>
    %16 = arith.maximumf %14, %15 : vector<8x128xf32>
    %c0_12 = arith.constant 0 : index
    %c0_13 = arith.constant 0 : index
    %17 = vector.load %arg6[%c0_12, %c0_13] : memref<1x128xf32, #tpu.memory_space<vmem>>, vector<1x128xf32>
    %18 = vector.broadcast %17 : vector<1x128xf32> to vector<8x128xf32>
    %19 = arith.mulf %16, %18 : vector<8x128xf32>
    %cst_14 = arith.constant dense<0.000000e+00> : vector<8xf32>
    %20 = vector.multi_reduction <add>, %19, %cst_14 [1] : vector<8x128xf32> to vector<8xf32>
    %21 = vector.shape_cast %20 : vector<8xf32> to vector<8x1xf32>
    %c0_15 = arith.constant 0 : index
    %c0_16 = arith.constant 0 : index
    %22 = vector.load %arg7[%c0_15, %c0_16] : memref<1x1xf32, #tpu.memory_space<vmem>>, vector<1x1xf32>
    %23 = vector.broadcast %22 : vector<1x1xf32> to vector<8x1xf32>
    %24 = arith.addf %21, %23 : vector<8x1xf32>
    %c0_17 = arith.constant 0 : index
    %c0_18 = arith.constant 0 : index
    %25 = vector.load %arg8[%c0_17, %c0_18] : memref<8x1xf32, #tpu.memory_space<vmem>>, vector<8x1xf32>
    tpu.vector_store %arg8[%c0_17, %c0_18], %24 {strides = array<i32>} : memref<8x1xf32, #tpu.memory_space<vmem>>, vector<8x1xf32>,
    return
  }
  func.func @transform_0(%arg0: i32) -> (i32, i32) {
    %c0_i32 = arith.constant 0 : i32
    %c0_i32_0 = arith.constant 0 : i32
    return %arg0, %c0_i32 : i32, i32
  }
  func.func @transform_1(%arg0: i32) -> (i32, i32) {
    %c0_i32 = arith.constant 0 : i32
    %c0_i32_0 = arith.constant 0 : i32
    %c0_i32_1 = arith.constant 0 : i32
    return %c0_i32, %c0_i32_0 : i32, i32
  }
  func.func @transform_2(%arg0: i32) -> (i32, i32) {
    %c0_i32 = arith.constant 0 : i32
    %c0_i32_0 = arith.constant 0 : i32
    %c0_i32_1 = arith.constant 0 : i32
    return %c0_i32, %c0_i32_0 : i32, i32
  }
  func.func @transform_3(%arg0: i32) -> (i32, i32) {
    %c0_i32 = arith.constant 0 : i32
    %c0_i32_0 = arith.constant 0 : i32
    %c0_i32_1 = arith.constant 0 : i32
    return %c0_i32, %c0_i32_0 : i32, i32
  }
  func.func @transform_4(%arg0: i32) -> (i32, i32) {
    %c0_i32 = arith.constant 0 : i32
    %c0_i32_0 = arith.constant 0 : i32
    %c0_i32_1 = arith.constant 0 : i32
    return %c0_i32, %c0_i32_0 : i32, i32
  }
  func.func @transform_5(%arg0: i32) -> (i32, i32) {
    %c0_i32 = arith.constant 0 : i32
    %c0_i32_0 = arith.constant 0 : i32
    %c0_i32_1 = arith.constant 0 : i32
    return %c0_i32, %c0_i32_0 : i32, i32
  }
  func.func @transform_6(%arg0: i32) -> (i32, i32) {
    %c0_i32 = arith.constant 0 : i32
    %c0_i32_0 = arith.constant 0 : i32
    %c0_i32_1 = arith.constant 0 : i32
    return %c0_i32, %c0_i32_0 : i32, i32
  }
  func.func @transform_7(%arg0: i32) -> (i32, i32) {
    %c0_i32 = arith.constant 0 : i32
    %c0_i32_0 = arith.constant 0 : i32
    return %arg0, %c0_i32 : i32, i32
  }
}

</mosaic_0001>

<llo_original>
// kernel: my_classifier_forward.1
$region0: #{my_classifier_forward.1}
  #allocation0 [shape = 'u32[]', space=smem, size = 0x4, offset = 0x4, fixed_abs, tag = 'smem constant byte address 0x4 - core index']
  #allocation1 [shape = 'u32[144,128]{1,0:T(1,128)}', space=vmem, size = 0x12000, scoped, tag = 'internal scratch']
  #allocation2 [shape = 'f32[1,1]{1,0:T(1,128)S(1)}', space=vmem, size = 0x200, scoped, tag = 'scoped memory for my_classifier_forward.1']
  %s0 = inlined_call_operand.vmem [shape: f32[8,1664], index: 0, kind: input, shape index: {}]
  %s1 = inlined_call_operand.hbm [shape: bf16[1664,256], index: 1, kind: input, shape index: {}]
  %s2 = inlined_call_operand.vmem [shape: f32[1,256], index: 2, kind: input, shape index: {}]
  %s3 = inlined_call_operand.vmem [shape: bf16[256,128], index: 3, kind: input, shape index: {}]
  %s4 = inlined_call_operand.vmem [shape: f32[1,128], index: 4, kind: input, shape index: {}]
  %s5 = inlined_call_operand.vmem [shape: f32[1,128], index: 5, kind: input, shape index: {}]
  %s6 = inlined_call_operand.<no memory space> [shape: f32[1,1], index: 6, kind: input, shape index: {}]
  %s7 = inlined_call_operand.vmem [shape: f32[8,1], index: 7, kind: output, shape index: {}]
  %s8 = sld [smem:[#allocation0]]
  $region42: #{my_classifier_forward.1} parent=0
    _
  %s10 = ssub.s32 1, %s8
  %s11 = scalar_select 0, %s10, %s8
  %v12 = vstv %s6
  %13 = vst [vmem:[#allocation2] sm:$0x1] %v12
  $region1: #{my_classifier_forward.1} parent=0
    #allocation3 [shape = 'u8[851968]{0}', space=vmem, size = 0xd0000, scoped, tag = 'input window, operand 1, single buffered']
    #allocation4 [shape = 's32[1]{0}', space=sflag, size = 0x4, scoped, tag = 'scoped memory for my_classifier_forward.1']
    %14 = vsyncpa [#allocation4], 0
    // Predicated region
    $region2: #{my_classifier_forward.1} parent=1 // pred_check
      _
    $region3: #{my_classifier_forward.1} parent=1 // pred_check_branch
      %16 = sbr.rel (0) target = $region5
    $region4: #{my_classifier_forward.1} parent=1 // pred_region
      _
    $region5: #{my_classifier_forward.1} parent=1 // pred_fallthru
      _
    // Predicated region
    $region6: #{my_classifier_forward.1} parent=1 // pred_check
      _
    $region7: #{my_classifier_forward.1} parent=1 // pred_check_branch
      %18 = sbr.rel (0) target = $region9
    $region8: #{my_classifier_forward.1} parent=1 // pred_region
      %s20 = ssub.s32 26624, 26624
      %21 = vsyncadd [#allocation4], %s20
      %s22 = sshll.u32 [#allocation3], 4
      %s23 = int_to_ptr.vmem [resolvable:$true] %s22
      %28 = dma.hbm_to_vmem [thread:$0]  %s1, 26624, %s23, [#allocation4], 128, 128, 8
    $region9: #{my_classifier_forward.1} parent=1 // pred_fallthru
      _
    // Predicated region
    $region10: #{my_classifier_forward.1} parent=1 // pred_check
      _
    $region11: #{my_classifier_forward.1} parent=1 // pred_check_branch
      %30 = sbr.rel (0) target = $region13
    $region12: #{my_classifier_forward.1} parent=1 // pred_region
      _
    $region13: #{my_classifier_forward.1} parent=1 // pred_fallthru
      _
    // Predicated region
    $region14: #{my_classifier_forward.1} parent=1 // pred_check
      _
    $region15: #{my_classifier_forward.1} parent=1 // pred_check_branch
      %32 = sbr.rel (0) target = $region17
    $region16: #{my_classifier_forward.1} parent=1 // pred_region
      _
    $region17: #{my_classifier_forward.1} parent=1 // pred_fallthru
      _
    // Predicated region
    $region18: #{my_classifier_forward.1} parent=1 // pred_check
      _
    $region19: #{my_classifier_forward.1} parent=1 // pred_check_branch
      %34 = sbr.rel (0) target = $region21
    $region20: #{my_classifier_forward.1} parent=1 // pred_region
      _
    $region21: #{my_classifier_forward.1} parent=1 // pred_fallthru
      _
    // Predicated region
    $region22: #{my_classifier_forward.1} parent=1 // pred_check
      _
    $region23: #{my_classifier_forward.1} parent=1 // pred_check_branch
      %36 = sbr.rel (0) target = $region25
    $region24: #{my_classifier_forward.1} parent=1 // pred_region
      _
    $region25: #{my_classifier_forward.1} parent=1 // pred_fallthru
      _
    // Predicated region
    $region26: #{my_classifier_forward.1} parent=1 // pred_check
      _
    $region27: #{my_classifier_forward.1} parent=1 // pred_check_branch
      %38 = sbr.rel (0) target = $region29
    $region28: #{my_classifier_forward.1} parent=1 // pred_region
      _
    $region29: #{my_classifier_forward.1} parent=1 // pred_fallthru
      _
    // Predicated region
    $region30: #{my_classifier_forward.1} parent=1 // pred_check
      _
    $region31: #{my_classifier_forward.1} parent=1 // pred_check_branch
      %40 = sbr.rel (0) target = $region33
    $region32: #{my_classifier_forward.1} parent=1 // pred_region
      %41 = dma.done [#allocation4], 26624
    $region33: #{my_classifier_forward.1} parent=1 // pred_fallthru
      _
    %v43 = vld [vmem:[%s0] sm:$0xff]
    %v44 = vld [vmem:[%s0 + $0x8] sm:$0xff]
    %v45 = vld [vmem:[%s0 + $0x10] sm:$0xff]
    %v46 = vld [vmem:[%s0 + $0x18] sm:$0xff]
    %v47 = vld [vmem:[%s0 + $0x20] sm:$0xff]
    %v48 = vld [vmem:[%s0 + $0x28] sm:$0xff]
    %v49 = vld [vmem:[%s0 + $0x30] sm:$0xff]
    %v50 = vld [vmem:[%s0 + $0x38] sm:$0xff]
    %v51 = vld [vmem:[%s0 + $0x40] sm:$0xff]
    %v52 = vld [vmem:[%s0 + $0x48] sm:$0xff]
    %v53 = vld [vmem:[%s0 + $0x50] sm:$0xff]
    %v54 = vld [vmem:[%s0 + $0x58] sm:$0xff]
    %v55 = vld [vmem:[%s0 + $0x60] sm:$0xff]
    %v56 = vpack.c.bf16 %v43, %v43
    %v57 = vpack.c.bf16 %v44, %v44
    %v58 = vpack.c.bf16 %v45, %v45
    %v59 = vpack.c.bf16 %v46, %v46
    %v60 = vpack.c.bf16 %v47, %v47
    %v61 = vpack.c.bf16 %v48, %v48
    %v62 = vpack.c.bf16 %v49, %v49
    %v63 = vpack.c.bf16 %v50, %v50
    %v64 = vpack.c.bf16 %v51, %v51
    %v65 = vpack.c.bf16 %v52, %v52
    %v66 = vpack.c.bf16 %v53, %v53
    %v67 = vpack.c.bf16 %v54, %v54
    %v68 = vpack.c.bf16 %v55, %v55
    %v69 = vld [vmem:[#allocation3] sm:$0xff]
    %v70 = vld [vmem:[#allocation3 + $0x8] sm:$0xff]
    %v71 = vld [vmem:[#allocation3 + $0x10] sm:$0xff]
    %v72 = vld [vmem:[#allocation3 + $0x18] sm:$0xff]
    %v73 = vld [vmem:[#allocation3 + $0x20] sm:$0xff]
    %v74 = vld [vmem:[#allocation3 + $0x28] sm:$0xff]
    %v75 = vld [vmem:[#allocation3 + $0x30] sm:$0xff]
    %v76 = vld [vmem:[#allocation3 + $0x38] sm:$0xff]
    %v77 = vld [vmem:[#allocation3 + $0x40] sm:$0xff]
    %v78 = vld [vmem:[#allocation3 + $0x48] sm:$0xff]
    %v79 = vld [vmem:[#allocation3 + $0x50] sm:$0xff]
    %v80 = vld [vmem:[#allocation3 + $0x58] sm:$0xff]
    %v81 = vld [vmem:[#allocation3 + $0x60] sm:$0xff]
    %v82 = vld [vmem:[#allocation3 + $0x68] sm:$0xff]
    %v83 = vld [vmem:[#allocation3 + $0x70] sm:$0xff]
    %v84 = vld [vmem:[#allocation3 + $0x78] sm:$0xff]
    %v85 = vld [vmem:[#allocation3 + $0x80] sm:$0xff]
    %v86 = vld [vmem:[#allocation3 + $0x88] sm:$0xff]
    %v87 = vld [vmem:[#allocation3 + $0x90] sm:$0xff]
    %v88 = vld [vmem:[#allocation3 + $0x98] sm:$0xff]
    %v89 = vld [vmem:[#allocation3 + $0xa0] sm:$0xff]
    %v90 = vld [vmem:[#allocation3 + $0xa8] sm:$0xff]
    %v91 = vld [vmem:[#allocation3 + $0xb0] sm:$0xff]
    %v92 = vld [vmem:[#allocation3 + $0xb8] sm:$0xff]
    %v93 = vld [vmem:[#allocation3 + $0xc0] sm:$0xff]
    %v94 = vld [vmem:[#allocation3 + $0xc8] sm:$0xff]
    %v95 = vld [vmem:[#allocation3 + $0xd0] sm:$0xff]
    %v96 = vld [vmem:[#allocation3 + $0xd8] sm:$0xff]
    %v97 = vld [vmem:[#allocation3 + $0xe0] sm:$0xff]
    %v98 = vld [vmem:[#allocation3 + $0xe8] sm:$0xff]
    %v99 = vld [vmem:[#allocation3 + $0xf0] sm:$0xff]
    %v100 = vld [vmem:[#allocation3 + $0xf8] sm:$0xff]
    %v101 = vld [vmem:[#allocation3 + $0x100] sm:$0xff]
    %v102 = vld [vmem:[#allocation3 + $0x108] sm:$0xff]
    %v103 = vld [vmem:[#allocation3 + $0x110] sm:$0xff]
    %v104 = vld [vmem:[#allocation3 + $0x118] sm:$0xff]
    %v105 = vld [vmem:[#allocation3 + $0x120] sm:$0xff]
    %v106 = vld [vmem:[#allocation3 + $0x128] sm:$0xff]
    %v107 = vld [vmem:[#allocation3 + $0x130] sm:$0xff]
    %v108 = vld [vmem:[#allocation3 + $0x138] sm:$0xff]
    %v109 = vld [vmem:[#allocation3 + $0x140] sm:$0xff]
    %v110 = vld [vmem:[#allocation3 + $0x148] sm:$0xff]
    %v111 = vld [vmem:[#allocation3 + $0x150] sm:$0xff]
    %v112 = vld [vmem:[#allocation3 + $0x158] sm:$0xff]
    %v113 = vld [vmem:[#allocation3 + $0x160] sm:$0xff]
    %v114 = vld [vmem:[#allocation3 + $0x168] sm:$0xff]
    %v115 = vld [vmem:[#allocation3 + $0x170] sm:$0xff]
    %v116 = vld [vmem:[#allocation3 + $0x178] sm:$0xff]
    %v117 = vld [vmem:[#allocation3 + $0x180] sm:$0xff]
    %v118 = vld [vmem:[#allocation3 + $0x188] sm:$0xff]
    %v119 = vld [vmem:[#allocation3 + $0x190] sm:$0xff]
    %v120 = vld [vmem:[#allocation3 + $0x198] sm:$0xff]
    %v121 = vld [vmem:[#allocation3 + $0x1a0] sm:$0xff]
    %v122 = vld [vmem:[#allocation3 + $0x1a8] sm:$0xff]
    %v123 = vld [vmem:[#allocation3 + $0x1b0] sm:$0xff]
    %v124 = vld [vmem:[#allocation3 + $0x1b8] sm:$0xff]
    %v125 = vld [vmem:[#allocation3 + $0x1c0] sm:$0xff]
    %v126 = vld [vmem:[#allocation3 + $0x1c8] sm:$0xff]
    %v127 = vld [vmem:[#allocation3 + $0x1d0] sm:$0xff]
    %v128 = vld [vmem:[#allocation3 + $0x1d8] sm:$0xff]
    %v129 = vld [vmem:[#allocation3 + $0x1e0] sm:$0xff]
    %v130 = vld [vmem:[#allocation3 + $0x1e8] sm:$0xff]
    %v131 = vld [vmem:[#allocation3 + $0x1f0] sm:$0xff]
    %v132 = vld [vmem:[#allocation3 + $0x1f8] sm:$0xff]
    %v133 = vld [vmem:[#allocation3 + $0x200] sm:$0xff]
    %v134 = vld [vmem:[#allocation3 + $0x208] sm:$0xff]
    %v135 = vld [vmem:[#allocation3 + $0x210] sm:$0xff]
    %v136 = vld [vmem:[#allocation3 + $0x218] sm:$0xff]
    %v137 = vld [vmem:[#allocation3 + $0x220] sm:$0xff]
    %v138 = vld [vmem:[#allocation3 + $0x228] sm:$0xff]
    %v139 = vld [vmem:[#allocation3 + $0x230] sm:$0xff]
    %v140 = vld [vmem:[#allocation3 + $0x238] sm:$0xff]
    %v141 = vld [vmem:[#allocation3 + $0x240] sm:$0xff]
    %v142 = vld [vmem:[#allocation3 + $0x248] sm:$0xff]
    %v143 = vld [vmem:[#allocation3 + $0x250] sm:$0xff]
    %v144 = vld [vmem:[#allocation3 + $0x258] sm:$0xff]
    %v145 = vld [vmem:[#allocation3 + $0x260] sm:$0xff]
    %v146 = vld [vmem:[#allocation3 + $0x268] sm:$0xff]
    %v147 = vld [vmem:[#allocation3 + $0x270] sm:$0xff]
    %v148 = vld [vmem:[#allocation3 + $0x278] sm:$0xff]
    %v149 = vld [vmem:[#allocation3 + $0x280] sm:$0xff]
    %v150 = vld [vmem:[#allocation3 + $0x288] sm:$0xff]
    %v151 = vld [vmem:[#allocation3 + $0x290] sm:$0xff]
    %v152 = vld [vmem:[#allocation3 + $0x298] sm:$0xff]
    %v153 = vld [vmem:[#allocation3 + $0x2a0] sm:$0xff]
    %v154 = vld [vmem:[#allocation3 + $0x2a8] sm:$0xff]
    %v155 = vld [vmem:[#allocation3 + $0x2b0] sm:$0xff]
    %v156 = vld [vmem:[#allocation3 + $0x2b8] sm:$0xff]
    %v157 = vld [vmem:[#allocation3 + $0x2c0] sm:$0xff]
    %v158 = vld [vmem:[#allocation3 + $0x2c8] sm:$0xff]
    %v159 = vld [vmem:[#allocation3 + $0x2d0] sm:$0xff]
    %v160 = vld [vmem:[#allocation3 + $0x2d8] sm:$0xff]
    %v161 = vld [vmem:[#allocation3 + $0x2e0] sm:$0xff]
    %v162 = vld [vmem:[#allocation3 + $0x2e8] sm:$0xff]
    %v163 = vld [vmem:[#allocation3 + $0x2f0] sm:$0xff]
    %v164 = vld [vmem:[#allocation3 + $0x2f8] sm:$0xff]
    %v165 = vld [vmem:[#allocation3 + $0x300] sm:$0xff]
    %v166 = vld [vmem:[#allocation3 + $0x308] sm:$0xff]
    %v167 = vld [vmem:[#allocation3 + $0x310] sm:$0xff]
    %v168 = vld [vmem:[#allocation3 + $0x318] sm:$0xff]
    %v169 = vld [vmem:[#allocation3 + $0x320] sm:$0xff]
    %v170 = vld [vmem:[#allocation3 + $0x328] sm:$0xff]
    %v171 = vld [vmem:[#allocation3 + $0x330] sm:$0xff]
    %v172 = vld [vmem:[#allocation3 + $0x338] sm:$0xff]
    %v173 = vld [vmem:[#allocation3 + $0x340] sm:$0xff]
    %v174 = vld [vmem:[#allocation3 + $0x348] sm:$0xff]
    %v175 = vld [vmem:[#allocation3 + $0x350] sm:$0xff]
    %v176 = vld [vmem:[#allocation3 + $0x358] sm:$0xff]
    %v177 = vld [vmem:[#allocation3 + $0x360] sm:$0xff]
    %v178 = vld [vmem:[#allocation3 + $0x368] sm:$0xff]
    %v179 = vld [vmem:[#allocation3 + $0x370] sm:$0xff]
    %v180 = vld [vmem:[#allocation3 + $0x378] sm:$0xff]
    %v181 = vld [vmem:[#allocation3 + $0x380] sm:$0xff]
    %v182 = vld [vmem:[#allocation3 + $0x388] sm:$0xff]
    %v183 = vld [vmem:[#allocation3 + $0x390] sm:$0xff]
    %v184 = vld [vmem:[#allocation3 + $0x398] sm:$0xff]
    %v185 = vld [vmem:[#allocation3 + $0x3a0] sm:$0xff]
    %v186 = vld [vmem:[#allocation3 + $0x3a8] sm:$0xff]
    %v187 = vld [vmem:[#allocation3 + $0x3b0] sm:$0xff]
    %v188 = vld [vmem:[#allocation3 + $0x3b8] sm:$0xff]
    %v189 = vld [vmem:[#allocation3 + $0x3c0] sm:$0xff]
    %v190 = vld [vmem:[#allocation3 + $0x3c8] sm:$0xff]
    %v191 = vld [vmem:[#allocation3 + $0x3d0] sm:$0xff]
    %v192 = vld [vmem:[#allocation3 + $0x3d8] sm:$0xff]
    %v193 = vld [vmem:[#allocation3 + $0x3e0] sm:$0xff]
    %v194 = vld [vmem:[#allocation3 + $0x3e8] sm:$0xff]
    %v195 = vld [vmem:[#allocation3 + $0x3f0] sm:$0xff]
    %v196 = vld [vmem:[#allocation3 + $0x3f8] sm:$0xff]
    %v197 = vld [vmem:[#allocation3 + $0x400] sm:$0xff]
    %v198 = vld [vmem:[#allocation3 + $0x408] sm:$0xff]
    %v199 = vld [vmem:[#allocation3 + $0x410] sm:$0xff]
    %v200 = vld [vmem:[#allocation3 + $0x418] sm:$0xff]
    %v201 = vld [vmem:[#allocation3 + $0x420] sm:$0xff]
    %v202 = vld [vmem:[#allocation3 + $0x428] sm:$0xff]
    %v203 = vld [vmem:[#allocation3 + $0x430] sm:$0xff]
    %v204 = vld [vmem:[#allocation3 + $0x438] sm:$0xff]
    %v205 = vld [vmem:[#allocation3 + $0x440] sm:$0xff]
    %v206 = vld [vmem:[#allocation3 + $0x448] sm:$0xff]
    %v207 = vld [vmem:[#allocation3 + $0x450] sm:$0xff]
    %v208 = vld [vmem:[#allocation3 + $0x458] sm:$0xff]
    %v209 = vld [vmem:[#allocation3 + $0x460] sm:$0xff]
    %v210 = vld [vmem:[#allocation3 + $0x468] sm:$0xff]
    %v211 = vld [vmem:[#allocation3 + $0x470] sm:$0xff]
    %v212 = vld [vmem:[#allocation3 + $0x478] sm:$0xff]
    %v213 = vld [vmem:[#allocation3 + $0x480] sm:$0xff]
    %v214 = vld [vmem:[#allocation3 + $0x488] sm:$0xff]
    %v215 = vld [vmem:[#allocation3 + $0x490] sm:$0xff]
    %v216 = vld [vmem:[#allocation3 + $0x498] sm:$0xff]
    %v217 = vld [vmem:[#allocation3 + $0x4a0] sm:$0xff]
    %v218 = vld [vmem:[#allocation3 + $0x4a8] sm:$0xff]
    %v219 = vld [vmem:[#allocation3 + $0x4b0] sm:$0xff]
    %v220 = vld [vmem:[#allocation3 + $0x4b8] sm:$0xff]
    %v221 = vld [vmem:[#allocation3 + $0x4c0] sm:$0xff]
    %v222 = vld [vmem:[#allocation3 + $0x4c8] sm:$0xff]
    %v223 = vld [vmem:[#allocation3 + $0x4d0] sm:$0xff]
    %v224 = vld [vmem:[#allocation3 + $0x4d8] sm:$0xff]
    %v225 = vld [vmem:[#allocation3 + $0x4e0] sm:$0xff]
    %v226 = vld [vmem:[#allocation3 + $0x4e8] sm:$0xff]
    %v227 = vld [vmem:[#allocation3 + $0x4f0] sm:$0xff]
    %v228 = vld [vmem:[#allocation3 + $0x4f8] sm:$0xff]
    %v229 = vld [vmem:[#allocation3 + $0x500] sm:$0xff]
    %v230 = vld [vmem:[#allocation3 + $0x508] sm:$0xff]
    %v231 = vld [vmem:[#allocation3 + $0x510] sm:$0xff]
    %v232 = vld [vmem:[#allocation3 + $0x518] sm:$0xff]
    %v233 = vld [vmem:[#allocation3 + $0x520] sm:$0xff]
    %v234 = vld [vmem:[#allocation3 + $0x528] sm:$0xff]
    %v235 = vld [vmem:[#allocation3 + $0x530] sm:$0xff]
    %v236 = vld [vmem:[#allocation3 + $0x538] sm:$0xff]
    %v237 = vld [vmem:[#allocation3 + $0x540] sm:$0xff]
    %v238 = vld [vmem:[#allocation3 + $0x548] sm:$0xff]
    %v239 = vld [vmem:[#allocation3 + $0x550] sm:$0xff]
    %v240 = vld [vmem:[#allocation3 + $0x558] sm:$0xff]
    %v241 = vld [vmem:[#allocation3 + $0x560] sm:$0xff]
    %v242 = vld [vmem:[#allocation3 + $0x568] sm:$0xff]
    %v243 = vld [vmem:[#allocation3 + $0x570] sm:$0xff]
    %v244 = vld [vmem:[#allocation3 + $0x578] sm:$0xff]
    %v245 = vld [vmem:[#allocation3 + $0x580] sm:$0xff]
    %v246 = vld [vmem:[#allocation3 + $0x588] sm:$0xff]
    %v247 = vld [vmem:[#allocation3 + $0x590] sm:$0xff]
    %v248 = vld [vmem:[#allocation3 + $0x598] sm:$0xff]
    %v249 = vld [vmem:[#allocation3 + $0x5a0] sm:$0xff]
    %v250 = vld [vmem:[#allocation3 + $0x5a8] sm:$0xff]
    %v251 = vld [vmem:[#allocation3 + $0x5b0] sm:$0xff]
    %v252 = vld [vmem:[#allocation3 + $0x5b8] sm:$0xff]
    %v253 = vld [vmem:[#allocation3 + $0x5c0] sm:$0xff]
    %v254 = vld [vmem:[#allocation3 + $0x5c8] sm:$0xff]
    %v255 = vld [vmem:[#allocation3 + $0x5d0] sm:$0xff]
    %v256 = vld [vmem:[#allocation3 + $0x5d8] sm:$0xff]
    %v257 = vld [vmem:[#allocation3 + $0x5e0] sm:$0xff]
    %v258 = vld [vmem:[#allocation3 + $0x5e8] sm:$0xff]
    %v259 = vld [vmem:[#allocation3 + $0x5f0] sm:$0xff]
    %v260 = vld [vmem:[#allocation3 + $0x5f8] sm:$0xff]
    %v261 = vld [vmem:[#allocation3 + $0x600] sm:$0xff]
    %v262 = vld [vmem:[#allocation3 + $0x608] sm:$0xff]
    %v263 = vld [vmem:[#allocation3 + $0x610] sm:$0xff]
    %v264 = vld [vmem:[#allocation3 + $0x618] sm:$0xff]
    %v265 = vld [vmem:[#allocation3 + $0x620] sm:$0xff]
    %v266 = vld [vmem:[#allocation3 + $0x628] sm:$0xff]
    %v267 = vld [vmem:[#allocation3 + $0x630] sm:$0xff]
    %v268 = vld [vmem:[#allocation3 + $0x638] sm:$0xff]
    %v269 = vld [vmem:[#allocation3 + $0x640] sm:$0xff]
    %v270 = vld [vmem:[#allocation3 + $0x648] sm:$0xff]
    %v271 = vld [vmem:[#allocation3 + $0x650] sm:$0xff]
    %v272 = vld [vmem:[#allocation3 + $0x658] sm:$0xff]
    %v273 = vld [vmem:[#allocation3 + $0x660] sm:$0xff]
    %v274 = vld [vmem:[#allocation3 + $0x668] sm:$0xff]
    %v275 = vld [vmem:[#allocation3 + $0x670] sm:$0xff]
    %v276 = vld [vmem:[#allocation3 + $0x678] sm:$0xff]
    %v277 = vld [vmem:[%s2] sm:$0x3]
    %v279 = vlaneseq
    %v280 = vshrl.u32 %v279, 7
    %v281 = vsub.s32 0, %v280
    %v282 = vrot.slane %v277, %v281
    %v283 = vlaneseq
    %v284 = vshrl.u32 %v283, 7
    %v285 = vsub.s32 1, %v284
    %v286 = vrot.slane %v277, %v285
    %v497 = vunpack.c.l.b16 %v69
    %v498 = vunpack.c.h.b16 %v69
    %v499 = vunpack.c.l.b16 %v70
    %v500 = vunpack.c.h.b16 %v70
    %v501 = vunpack.c.l.b16 %v71
    %v502 = vunpack.c.h.b16 %v71
    %v503 = vunpack.c.l.b16 %v72
    %v504 = vunpack.c.h.b16 %v72
    %v505 = vunpack.c.l.b16 %v73
    %v506 = vunpack.c.h.b16 %v73
    %v507 = vunpack.c.l.b16 %v74
    %v508 = vunpack.c.h.b16 %v74
    %v509 = vunpack.c.l.b16 %v75
    %v510 = vunpack.c.h.b16 %v75
    %v511 = vunpack.c.l.b16 %v76
    %v512 = vunpack.c.h.b16 %v76
    %v513 = vunpack.c.l.b16 %v77
    %v514 = vunpack.c.h.b16 %v77
    %v515 = vunpack.c.l.b16 %v78
    %v516 = vunpack.c.h.b16 %v78
    %v517 = vunpack.c.l.b16 %v79
    %v518 = vunpack.c.h.b16 %v79
    %v519 = vunpack.c.l.b16 %v80
    %v520 = vunpack.c.h.b16 %v80
    %v521 = vunpack.c.l.b16 %v81
    %v522 = vunpack.c.h.b16 %v81
    %v523 = vunpack.c.l.b16 %v82
    %v524 = vunpack.c.h.b16 %v82
    %v525 = vunpack.c.l.b16 %v83
    %v526 = vunpack.c.h.b16 %v83
    %v527 = vunpack.c.l.b16 %v84
    %v528 = vunpack.c.h.b16 %v84
    %v529 = vunpack.c.l.b16 %v85
    %v530 = vunpack.c.h.b16 %v85
    %v531 = vunpack.c.l.b16 %v86
    %v532 = vunpack.c.h.b16 %v86
    %v533 = vunpack.c.l.b16 %v87
    %v534 = vunpack.c.h.b16 %v87
    %v535 = vunpack.c.l.b16 %v88
    %v536 = vunpack.c.h.b16 %v88
    %v537 = vunpack.c.l.b16 %v89
    %v538 = vunpack.c.h.b16 %v89
    %v539 = vunpack.c.l.b16 %v90
    %v540 = vunpack.c.h.b16 %v90
    %v541 = vunpack.c.l.b16 %v91
    %v542 = vunpack.c.h.b16 %v91
    %v543 = vunpack.c.l.b16 %v92
    %v544 = vunpack.c.h.b16 %v92
    %v545 = vunpack.c.l.b16 %v93
    %v546 = vunpack.c.h.b16 %v93
    %v547 = vunpack.c.l.b16 %v94
    %v548 = vunpack.c.h.b16 %v94
    %v549 = vunpack.c.l.b16 %v95
    %v550 = vunpack.c.h.b16 %v95
    %v551 = vunpack.c.l.b16 %v96
    %v552 = vunpack.c.h.b16 %v96
    %v553 = vunpack.c.l.b16 %v97
    %v554 = vunpack.c.h.b16 %v97
    %v555 = vunpack.c.l.b16 %v98
    %v556 = vunpack.c.h.b16 %v98
    %v557 = vunpack.c.l.b16 %v99
    %v558 = vunpack.c.h.b16 %v99
    %v559 = vunpack.c.l.b16 %v100
    %v560 = vunpack.c.h.b16 %v100
    %v561 = vunpack.c.l.b16 %v101
    %v562 = vunpack.c.h.b16 %v101
    %v563 = vunpack.c.l.b16 %v102
    %v564 = vunpack.c.h.b16 %v102
    %v565 = vunpack.c.l.b16 %v103
    %v566 = vunpack.c.h.b16 %v103
    %v567 = vunpack.c.l.b16 %v104
    %v568 = vunpack.c.h.b16 %v104
    %v569 = vunpack.c.l.b16 %v105
    %v570 = vunpack.c.h.b16 %v105
    %v571 = vunpack.c.l.b16 %v106
    %v572 = vunpack.c.h.b16 %v106
    %v573 = vunpack.c.l.b16 %v107
    %v574 = vunpack.c.h.b16 %v107
    %v575 = vunpack.c.l.b16 %v108
    %v576 = vunpack.c.h.b16 %v108
    %v577 = vunpack.c.l.b16 %v109
    %v578 = vunpack.c.h.b16 %v109
    %v579 = vunpack.c.l.b16 %v110
    %v580 = vunpack.c.h.b16 %v110
    %v581 = vunpack.c.l.b16 %v111
    %v582 = vunpack.c.h.b16 %v111
    %v583 = vunpack.c.l.b16 %v112
    %v584 = vunpack.c.h.b16 %v112
    %v585 = vunpack.c.l.b16 %v113
    %v586 = vunpack.c.h.b16 %v113
    %v587 = vunpack.c.l.b16 %v114
    %v588 = vunpack.c.h.b16 %v114
    %v589 = vunpack.c.l.b16 %v115
    %v590 = vunpack.c.h.b16 %v115
    %v591 = vunpack.c.l.b16 %v116
    %v592 = vunpack.c.h.b16 %v116
    %v593 = vunpack.c.l.b16 %v117
    %v594 = vunpack.c.h.b16 %v117
    %v595 = vunpack.c.l.b16 %v118
    %v596 = vunpack.c.h.b16 %v118
    %v597 = vunpack.c.l.b16 %v119
    %v598 = vunpack.c.h.b16 %v119
    %v599 = vunpack.c.l.b16 %v120
    %v600 = vunpack.c.h.b16 %v120
    %v601 = vunpack.c.l.b16 %v121
    %v602 = vunpack.c.h.b16 %v121
    %v603 = vunpack.c.l.b16 %v122
    %v604 = vunpack.c.h.b16 %v122
    %v605 = vunpack.c.l.b16 %v123
    %v606 = vunpack.c.h.b16 %v123
    %v607 = vunpack.c.l.b16 %v124
    %v608 = vunpack.c.h.b16 %v124
    %v609 = vunpack.c.l.b16 %v125
    %v610 = vunpack.c.h.b16 %v125
    %v611 = vunpack.c.l.b16 %v126
    %v612 = vunpack.c.h.b16 %v126
    %v613 = vunpack.c.l.b16 %v127
    %v614 = vunpack.c.h.b16 %v127
    %v615 = vunpack.c.l.b16 %v128
    %v616 = vunpack.c.h.b16 %v128
    %v617 = vunpack.c.l.b16 %v129
    %v618 = vunpack.c.h.b16 %v129
    %v619 = vunpack.c.l.b16 %v130
    %v620 = vunpack.c.h.b16 %v130
    %v621 = vunpack.c.l.b16 %v131
    %v622 = vunpack.c.h.b16 %v131
    %v623 = vunpack.c.l.b16 %v132
    %v624 = vunpack.c.h.b16 %v132
    %v625 = vunpack.c.l.b16 %v133
    %v626 = vunpack.c.h.b16 %v133
    %v627 = vunpack.c.l.b16 %v134
    %v628 = vunpack.c.h.b16 %v134
    %v629 = vunpack.c.l.b16 %v135
    %v630 = vunpack.c.h.b16 %v135
    %v631 = vunpack.c.l.b16 %v136
    %v632 = vunpack.c.h.b16 %v136
    %v633 = vunpack.c.l.b16 %v137
    %v634 = vunpack.c.h.b16 %v137
    %v635 = vunpack.c.l.b16 %v138
    %v636 = vunpack.c.h.b16 %v138
    %v637 = vunpack.c.l.b16 %v139
    %v638 = vunpack.c.h.b16 %v139
    %v639 = vunpack.c.l.b16 %v140
    %v640 = vunpack.c.h.b16 %v140
    %v641 = vunpack.c.l.b16 %v141
    %v642 = vunpack.c.h.b16 %v141
    %v643 = vunpack.c.l.b16 %v142
    %v644 = vunpack.c.h.b16 %v142
    %v645 = vunpack.c.l.b16 %v143
    %v646 = vunpack.c.h.b16 %v143
    %v647 = vunpack.c.l.b16 %v144
    %v648 = vunpack.c.h.b16 %v144
    %v649 = vunpack.c.l.b16 %v145
    %v650 = vunpack.c.h.b16 %v145
    %v651 = vunpack.c.l.b16 %v146
    %v652 = vunpack.c.h.b16 %v146
    %v653 = vunpack.c.l.b16 %v147
    %v654 = vunpack.c.h.b16 %v147
    %v655 = vunpack.c.l.b16 %v148
    %v656 = vunpack.c.h.b16 %v148
    %v657 = vunpack.c.l.b16 %v149
    %v658 = vunpack.c.h.b16 %v149
    %v659 = vunpack.c.l.b16 %v150
    %v660 = vunpack.c.h.b16 %v150
    %v661 = vunpack.c.l.b16 %v151
    %v662 = vunpack.c.h.b16 %v151
    %v663 = vunpack.c.l.b16 %v152
    %v664 = vunpack.c.h.b16 %v152
    %v665 = vunpack.c.l.b16 %v153
    %v666 = vunpack.c.h.b16 %v153
    %v667 = vunpack.c.l.b16 %v154
    %v668 = vunpack.c.h.b16 %v154
    %v669 = vunpack.c.l.b16 %v155
    %v670 = vunpack.c.h.b16 %v155
    %v671 = vunpack.c.l.b16 %v156
    %v672 = vunpack.c.h.b16 %v156
    %v673 = vunpack.c.l.b16 %v157
    %v674 = vunpack.c.h.b16 %v157
    %v675 = vunpack.c.l.b16 %v158
    %v676 = vunpack.c.h.b16 %v158
    %v677 = vunpack.c.l.b16 %v159
    %v678 = vunpack.c.h.b16 %v159
    %v679 = vunpack.c.l.b16 %v160
    %v680 = vunpack.c.h.b16 %v160
    %v681 = vunpack.c.l.b16 %v161
    %v682 = vunpack.c.h.b16 %v161
    %v683 = vunpack.c.l.b16 %v162
    %v684 = vunpack.c.h.b16 %v162
    %v685 = vunpack.c.l.b16 %v163
    %v686 = vunpack.c.h.b16 %v163
    %v687 = vunpack.c.l.b16 %v164
    %v688 = vunpack.c.h.b16 %v164
    %v689 = vunpack.c.l.b16 %v165
    %v690 = vunpack.c.h.b16 %v165
    %v691 = vunpack.c.l.b16 %v166
    %v692 = vunpack.c.h.b16 %v166
    %v693 = vunpack.c.l.b16 %v167
    %v694 = vunpack.c.h.b16 %v167
    %v695 = vunpack.c.l.b16 %v168
    %v696 = vunpack.c.h.b16 %v168
    %v697 = vunpack.c.l.b16 %v169
    %v698 = vunpack.c.h.b16 %v169
    %v699 = vunpack.c.l.b16 %v170
    %v700 = vunpack.c.h.b16 %v170
    %v701 = vunpack.c.l.b16 %v171
    %v702 = vunpack.c.h.b16 %v171
    %v703 = vunpack.c.l.b16 %v172
    %v704 = vunpack.c.h.b16 %v172
    %v705 = vunpack.c.l.b16 %v173
    %v706 = vunpack.c.h.b16 %v173
    %v707 = vunpack.c.l.b16 %v174
    %v708 = vunpack.c.h.b16 %v174
    %v709 = vunpack.c.l.b16 %v175
    %v710 = vunpack.c.h.b16 %v175
    %v711 = vunpack.c.l.b16 %v176
    %v712 = vunpack.c.h.b16 %v176
    %v713 = vunpack.c.l.b16 %v177
    %v714 = vunpack.c.h.b16 %v177
    %v715 = vunpack.c.l.b16 %v178
    %v716 = vunpack.c.h.b16 %v178
    %v717 = vunpack.c.l.b16 %v179
    %v718 = vunpack.c.h.b16 %v179
    %v719 = vunpack.c.l.b16 %v180
    %v720 = vunpack.c.h.b16 %v180
    %v721 = vunpack.c.l.b16 %v181
    %v722 = vunpack.c.h.b16 %v181
    %v723 = vunpack.c.l.b16 %v182
    %v724 = vunpack.c.h.b16 %v182
    %v725 = vunpack.c.l.b16 %v183
    %v726 = vunpack.c.h.b16 %v183
    %v727 = vunpack.c.l.b16 %v184
    %v728 = vunpack.c.h.b16 %v184
    %v729 = vunpack.c.l.b16 %v185
    %v730 = vunpack.c.h.b16 %v185
    %v731 = vunpack.c.l.b16 %v186
    %v732 = vunpack.c.h.b16 %v186
    %v733 = vunpack.c.l.b16 %v187
    %v734 = vunpack.c.h.b16 %v187
    %v735 = vunpack.c.l.b16 %v188
    %v736 = vunpack.c.h.b16 %v188
    %v737 = vunpack.c.l.b16 %v189
    %v738 = vunpack.c.h.b16 %v189
    %v739 = vunpack.c.l.b16 %v190
    %v740 = vunpack.c.h.b16 %v190
    %v741 = vunpack.c.l.b16 %v191
    %v742 = vunpack.c.h.b16 %v191
    %v743 = vunpack.c.l.b16 %v192
    %v744 = vunpack.c.h.b16 %v192
    %v745 = vunpack.c.l.b16 %v193
    %v746 = vunpack.c.h.b16 %v193
    %v747 = vunpack.c.l.b16 %v194
    %v748 = vunpack.c.h.b16 %v194
    %v749 = vunpack.c.l.b16 %v195
    %v750 = vunpack.c.h.b16 %v195
    %v751 = vunpack.c.l.b16 %v196
    %v752 = vunpack.c.h.b16 %v196
    %v753 = vunpack.c.l.b16 %v197
    %v754 = vunpack.c.h.b16 %v197
    %v755 = vunpack.c.l.b16 %v198
    %v756 = vunpack.c.h.b16 %v198
    %v757 = vunpack.c.l.b16 %v199
    %v758 = vunpack.c.h.b16 %v199
    %v759 = vunpack.c.l.b16 %v200
    %v760 = vunpack.c.h.b16 %v200
    %v761 = vunpack.c.l.b16 %v201
    %v762 = vunpack.c.h.b16 %v201
    %v763 = vunpack.c.l.b16 %v202
    %v764 = vunpack.c.h.b16 %v202
    %v765 = vunpack.c.l.b16 %v203
    %v766 = vunpack.c.h.b16 %v203
    %v767 = vunpack.c.l.b16 %v204
    %v768 = vunpack.c.h.b16 %v204
    %v769 = vunpack.c.l.b16 %v205
    %v770 = vunpack.c.h.b16 %v205
    %v771 = vunpack.c.l.b16 %v206
    %v772 = vunpack.c.h.b16 %v206
    %v773 = vunpack.c.l.b16 %v207
    %v774 = vunpack.c.h.b16 %v207
    %v775 = vunpack.c.l.b16 %v208
    %v776 = vunpack.c.h.b16 %v208
    %v777 = vunpack.c.l.b16 %v209
    %v778 = vunpack.c.h.b16 %v209
    %v779 = vunpack.c.l.b16 %v210
    %v780 = vunpack.c.h.b16 %v210
    %v781 = vunpack.c.l.b16 %v211
    %v782 = vunpack.c.h.b16 %v211
    %v783 = vunpack.c.l.b16 %v212
    %v784 = vunpack.c.h.b16 %v212
    %v785 = vunpack.c.l.b16 %v213
    %v786 = vunpack.c.h.b16 %v213
    %v787 = vunpack.c.l.b16 %v214
    %v788 = vunpack.c.h.b16 %v214
    %v789 = vunpack.c.l.b16 %v215
    %v790 = vunpack.c.h.b16 %v215
    %v791 = vunpack.c.l.b16 %v216
    %v792 = vunpack.c.h.b16 %v216
    %v793 = vunpack.c.l.b16 %v217
    %v794 = vunpack.c.h.b16 %v217
    %v795 = vunpack.c.l.b16 %v218
    %v796 = vunpack.c.h.b16 %v218
    %v797 = vunpack.c.l.b16 %v219
    %v798 = vunpack.c.h.b16 %v219
    %v799 = vunpack.c.l.b16 %v220
    %v800 = vunpack.c.h.b16 %v220
    %v801 = vunpack.c.l.b16 %v221
    %v802 = vunpack.c.h.b16 %v221
    %v803 = vunpack.c.l.b16 %v222
    %v804 = vunpack.c.h.b16 %v222
    %v805 = vunpack.c.l.b16 %v223
    %v806 = vunpack.c.h.b16 %v223
    %v807 = vunpack.c.l.b16 %v224
    %v808 = vunpack.c.h.b16 %v224
    %v809 = vunpack.c.l.b16 %v225
    %v810 = vunpack.c.h.b16 %v225
    %v811 = vunpack.c.l.b16 %v226
    %v812 = vunpack.c.h.b16 %v226
    %v813 = vunpack.c.l.b16 %v227
    %v814 = vunpack.c.h.b16 %v227
    %v815 = vunpack.c.l.b16 %v228
    %v816 = vunpack.c.h.b16 %v228
    %v817 = vunpack.c.l.b16 %v229
    %v818 = vunpack.c.h.b16 %v229
    %v819 = vunpack.c.l.b16 %v230
    %v820 = vunpack.c.h.b16 %v230
    %v821 = vunpack.c.l.b16 %v231
    %v822 = vunpack.c.h.b16 %v231
    %v823 = vunpack.c.l.b16 %v232
    %v824 = vunpack.c.h.b16 %v232
    %v825 = vunpack.c.l.b16 %v233
    %v826 = vunpack.c.h.b16 %v233
    %v827 = vunpack.c.l.b16 %v234
    %v828 = vunpack.c.h.b16 %v234
    %v829 = vunpack.c.l.b16 %v235
    %v830 = vunpack.c.h.b16 %v235
    %v831 = vunpack.c.l.b16 %v236
    %v832 = vunpack.c.h.b16 %v236
    %v833 = vunpack.c.l.b16 %v237
    %v834 = vunpack.c.h.b16 %v237
    %v835 = vunpack.c.l.b16 %v238
    %v836 = vunpack.c.h.b16 %v238
    %v837 = vunpack.c.l.b16 %v239
    %v838 = vunpack.c.h.b16 %v239
    %v839 = vunpack.c.l.b16 %v240
    %v840 = vunpack.c.h.b16 %v240
    %v841 = vunpack.c.l.b16 %v241
    %v842 = vunpack.c.h.b16 %v241
    %v843 = vunpack.c.l.b16 %v242
    %v844 = vunpack.c.h.b16 %v242
    %v845 = vunpack.c.l.b16 %v243
    %v846 = vunpack.c.h.b16 %v243
    %v847 = vunpack.c.l.b16 %v244
    %v848 = vunpack.c.h.b16 %v244
    %v849 = vunpack.c.l.b16 %v245
    %v850 = vunpack.c.h.b16 %v245
    %v851 = vunpack.c.l.b16 %v246
    %v852 = vunpack.c.h.b16 %v246
    %v853 = vunpack.c.l.b16 %v247
    %v854 = vunpack.c.h.b16 %v247
    %v855 = vunpack.c.l.b16 %v248
    %v856 = vunpack.c.h.b16 %v248
    %v857 = vunpack.c.l.b16 %v249
    %v858 = vunpack.c.h.b16 %v249
    %v859 = vunpack.c.l.b16 %v250
    %v860 = vunpack.c.h.b16 %v250
    %v861 = vunpack.c.l.b16 %v251
    %v862 = vunpack.c.h.b16 %v251
    %v863 = vunpack.c.l.b16 %v252
    %v864 = vunpack.c.h.b16 %v252
    %v865 = vunpack.c.l.b16 %v253
    %v866 = vunpack.c.h.b16 %v253
    %v867 = vunpack.c.l.b16 %v254
    %v868 = vunpack.c.h.b16 %v254
    %v869 = vunpack.c.l.b16 %v255
    %v870 = vunpack.c.h.b16 %v255
    %v871 = vunpack.c.l.b16 %v256
    %v872 = vunpack.c.h.b16 %v256
    %v873 = vunpack.c.l.b16 %v257
    %v874 = vunpack.c.h.b16 %v257
    %v875 = vunpack.c.l.b16 %v258
    %v876 = vunpack.c.h.b16 %v258
    %v877 = vunpack.c.l.b16 %v259
    %v878 = vunpack.c.h.b16 %v259
    %v879 = vunpack.c.l.b16 %v260
    %v880 = vunpack.c.h.b16 %v260
    %v881 = vunpack.c.l.b16 %v261
    %v882 = vunpack.c.h.b16 %v261
    %v883 = vunpack.c.l.b16 %v262
    %v884 = vunpack.c.h.b16 %v262
    %v885 = vunpack.c.l.b16 %v263
    %v886 = vunpack.c.h.b16 %v263
    %v887 = vunpack.c.l.b16 %v264
    %v888 = vunpack.c.h.b16 %v264
    %v889 = vunpack.c.l.b16 %v265
    %v890 = vunpack.c.h.b16 %v265
    %v891 = vunpack.c.l.b16 %v266
    %v892 = vunpack.c.h.b16 %v266
    %v893 = vunpack.c.l.b16 %v267
    %v894 = vunpack.c.h.b16 %v267
    %v895 = vunpack.c.l.b16 %v268
    %v896 = vunpack.c.h.b16 %v268
    %v897 = vunpack.c.l.b16 %v269
    %v898 = vunpack.c.h.b16 %v269
    %v899 = vunpack.c.l.b16 %v270
    %v900 = vunpack.c.h.b16 %v270
    %v901 = vunpack.c.l.b16 %v271
    %v902 = vunpack.c.h.b16 %v271
    %v903 = vunpack.c.l.b16 %v272
    %v904 = vunpack.c.h.b16 %v272
    %v905 = vunpack.c.l.b16 %v273
    %v906 = vunpack.c.h.b16 %v273
    %v907 = vunpack.c.l.b16 %v274
    %v908 = vunpack.c.h.b16 %v274
    %v909 = vunpack.c.l.b16 %v275
    %v910 = vunpack.c.h.b16 %v275
    %v911 = vunpack.c.l.b16 %v276
    %v912 = vunpack.c.h.b16 %v276
    %v913 = vpack.c.b16 %v499, %v497
    %v914 = vpack.c.b16 %v500, %v498
    %v915 = vpack.c.b16 %v503, %v501
    %v916 = vpack.c.b16 %v504, %v502
    %v917 = vpack.c.b16 %v507, %v505
    %v918 = vpack.c.b16 %v508, %v506
    %v919 = vpack.c.b16 %v511, %v509
    %v920 = vpack.c.b16 %v512, %v510
    %v921 = vpack.c.b16 %v515, %v513
    %v922 = vpack.c.b16 %v516, %v514
    %v923 = vpack.c.b16 %v519, %v517
    %v924 = vpack.c.b16 %v520, %v518
    %v925 = vpack.c.b16 %v523, %v521
    %v926 = vpack.c.b16 %v524, %v522
    %v927 = vpack.c.b16 %v527, %v525
    %v928 = vpack.c.b16 %v528, %v526
    %v929 = vpack.c.b16 %v531, %v529
    %v930 = vpack.c.b16 %v532, %v530
    %v931 = vpack.c.b16 %v535, %v533
    %v932 = vpack.c.b16 %v536, %v534
    %v933 = vpack.c.b16 %v539, %v537
    %v934 = vpack.c.b16 %v540, %v538
    %v935 = vpack.c.b16 %v543, %v541
    %v936 = vpack.c.b16 %v544, %v542
    %v937 = vpack.c.b16 %v547, %v545
    %v938 = vpack.c.b16 %v548, %v546
    %v939 = vpack.c.b16 %v551, %v549
    %v940 = vpack.c.b16 %v552, %v550
    %v941 = vpack.c.b16 %v555, %v553
    %v942 = vpack.c.b16 %v556, %v554
    %v943 = vpack.c.b16 %v559, %v557
    %v944 = vpack.c.b16 %v560, %v558
    %v945 = vpack.c.b16 %v563, %v561
    %v946 = vpack.c.b16 %v564, %v562
    %v947 = vpack.c.b16 %v567, %v565
    %v948 = vpack.c.b16 %v568, %v566
    %v949 = vpack.c.b16 %v571, %v569
    %v950 = vpack.c.b16 %v572, %v570
    %v951 = vpack.c.b16 %v575, %v573
    %v952 = vpack.c.b16 %v576, %v574
    %v953 = vpack.c.b16 %v579, %v577
    %v954 = vpack.c.b16 %v580, %v578
    %v955 = vpack.c.b16 %v583, %v581
    %v956 = vpack.c.b16 %v584, %v582
    %v957 = vpack.c.b16 %v587, %v585
    %v958 = vpack.c.b16 %v588, %v586
    %v959 = vpack.c.b16 %v591, %v589
    %v960 = vpack.c.b16 %v592, %v590
    %v961 = vpack.c.b16 %v595, %v593
    %v962 = vpack.c.b16 %v596, %v594
    %v963 = vpack.c.b16 %v599, %v597
    %v964 = vpack.c.b16 %v600, %v598
    %v965 = vpack.c.b16 %v603, %v601
    %v966 = vpack.c.b16 %v604, %v602
    %v967 = vpack.c.b16 %v607, %v605
    %v968 = vpack.c.b16 %v608, %v606
    %v969 = vpack.c.b16 %v611, %v609
    %v970 = vpack.c.b16 %v612, %v610
    %v971 = vpack.c.b16 %v615, %v613
    %v972 = vpack.c.b16 %v616, %v614
    %v973 = vpack.c.b16 %v619, %v617
    %v974 = vpack.c.b16 %v620, %v618
    %v975 = vpack.c.b16 %v623, %v621
    %v976 = vpack.c.b16 %v624, %v622
    %v977 = vpack.c.b16 %v627, %v625
    %v978 = vpack.c.b16 %v628, %v626
    %v979 = vpack.c.b16 %v631, %v629
    %v980 = vpack.c.b16 %v632, %v630
    %v981 = vpack.c.b16 %v635, %v633
    %v982 = vpack.c.b16 %v636, %v634
    %v983 = vpack.c.b16 %v639, %v637
    %v984 = vpack.c.b16 %v640, %v638
    %v985 = vpack.c.b16 %v643, %v641
    %v986 = vpack.c.b16 %v644, %v642
    %v987 = vpack.c.b16 %v647, %v645
    %v988 = vpack.c.b16 %v648, %v646
    %v989 = vpack.c.b16 %v651, %v649
    %v990 = vpack.c.b16 %v652, %v650
    %v991 = vpack.c.b16 %v655, %v653
    %v992 = vpack.c.b16 %v656, %v654
    %v993 = vpack.c.b16 %v659, %v657
    %v994 = vpack.c.b16 %v660, %v658
    %v995 = vpack.c.b16 %v663, %v661
    %v996 = vpack.c.b16 %v664, %v662
    %v997 = vpack.c.b16 %v667, %v665
    %v998 = vpack.c.b16 %v668, %v666
    %v999 = vpack.c.b16 %v671, %v669
    %v1000 = vpack.c.b16 %v672, %v670
    %v1001 = vpack.c.b16 %v675, %v673
    %v1002 = vpack.c.b16 %v676, %v674
    %v1003 = vpack.c.b16 %v679, %v677
    %v1004 = vpack.c.b16 %v680, %v678
    %v1005 = vpack.c.b16 %v683, %v681
    %v1006 = vpack.c.b16 %v684, %v682
    %v1007 = vpack.c.b16 %v687, %v685
    %v1008 = vpack.c.b16 %v688, %v686
    %v1009 = vpack.c.b16 %v691, %v689
    %v1010 = vpack.c.b16 %v692, %v690
    %v1011 = vpack.c.b16 %v695, %v693
    %v1012 = vpack.c.b16 %v696, %v694
    %v1013 = vpack.c.b16 %v699, %v697
    %v1014 = vpack.c.b16 %v700, %v698
    %v1015 = vpack.c.b16 %v703, %v701
    %v1016 = vpack.c.b16 %v704, %v702
    %v1017 = vpack.c.b16 %v707, %v705
    %v1018 = vpack.c.b16 %v708, %v706
    %v1019 = vpack.c.b16 %v711, %v709
    %v1020 = vpack.c.b16 %v712, %v710
    %v1021 = vpack.c.b16 %v715, %v713
    %v1022 = vpack.c.b16 %v716, %v714
    %v1023 = vpack.c.b16 %v719, %v717
    %v1024 = vpack.c.b16 %v720, %v718
    %v1025 = vpack.c.b16 %v723, %v721
    %v1026 = vpack.c.b16 %v724, %v722
    %v1027 = vpack.c.b16 %v727, %v725
    %v1028 = vpack.c.b16 %v728, %v726
    %v1029 = vpack.c.b16 %v731, %v729
    %v1030 = vpack.c.b16 %v732, %v730
    %v1031 = vpack.c.b16 %v735, %v733
    %v1032 = vpack.c.b16 %v736, %v734
    %v1033 = vpack.c.b16 %v739, %v737
    %v1034 = vpack.c.b16 %v740, %v738
    %v1035 = vpack.c.b16 %v743, %v741
    %v1036 = vpack.c.b16 %v744, %v742
    %v1037 = vpack.c.b16 %v747, %v745
    %v1038 = vpack.c.b16 %v748, %v746
    %v1039 = vpack.c.b16 %v751, %v749
    %v1040 = vpack.c.b16 %v752, %v750
    %v1041 = vpack.c.b16 %v755, %v753
    %v1042 = vpack.c.b16 %v756, %v754
    %v1043 = vpack.c.b16 %v759, %v757
    %v1044 = vpack.c.b16 %v760, %v758
    %v1045 = vpack.c.b16 %v763, %v761
    %v1046 = vpack.c.b16 %v764, %v762
    %v1047 = vpack.c.b16 %v767, %v765
    %v1048 = vpack.c.b16 %v768, %v766
    %v1049 = vpack.c.b16 %v771, %v769
    %v1050 = vpack.c.b16 %v772, %v770
    %v1051 = vpack.c.b16 %v775, %v773
    %v1052 = vpack.c.b16 %v776, %v774
    %v1053 = vpack.c.b16 %v779, %v777
    %v1054 = vpack.c.b16 %v780, %v778
    %v1055 = vpack.c.b16 %v783, %v781
    %v1056 = vpack.c.b16 %v784, %v782
    %v1057 = vpack.c.b16 %v787, %v785
    %v1058 = vpack.c.b16 %v788, %v786
    %v1059 = vpack.c.b16 %v791, %v789
    %v1060 = vpack.c.b16 %v792, %v790
    %v1061 = vpack.c.b16 %v795, %v793
    %v1062 = vpack.c.b16 %v796, %v794
    %v1063 = vpack.c.b16 %v799, %v797
    %v1064 = vpack.c.b16 %v800, %v798
    %v1065 = vpack.c.b16 %v803, %v801
    %v1066 = vpack.c.b16 %v804, %v802
    %v1067 = vpack.c.b16 %v807, %v805
    %v1068 = vpack.c.b16 %v808, %v806
    %v1069 = vpack.c.b16 %v811, %v809
    %v1070 = vpack.c.b16 %v812, %v810
    %v1071 = vpack.c.b16 %v815, %v813
    %v1072 = vpack.c.b16 %v816, %v814
    %v1073 = vpack.c.b16 %v819, %v817
    %v1074 = vpack.c.b16 %v820, %v818
    %v1075 = vpack.c.b16 %v823, %v821
    %v1076 = vpack.c.b16 %v824, %v822
    %v1077 = vpack.c.b16 %v827, %v825
    %v1078 = vpack.c.b16 %v828, %v826
    %v1079 = vpack.c.b16 %v831, %v829
    %v1080 = vpack.c.b16 %v832, %v830
    %v1081 = vpack.c.b16 %v835, %v833
    %v1082 = vpack.c.b16 %v836, %v834
    %v1083 = vpack.c.b16 %v839, %v837
    %v1084 = vpack.c.b16 %v840, %v838
    %v1085 = vpack.c.b16 %v843, %v841
    %v1086 = vpack.c.b16 %v844, %v842
    %v1087 = vpack.c.b16 %v847, %v845
    %v1088 = vpack.c.b16 %v848, %v846
    %v1089 = vpack.c.b16 %v851, %v849
    %v1090 = vpack.c.b16 %v852, %v850
    %v1091 = vpack.c.b16 %v855, %v853
    %v1092 = vpack.c.b16 %v856, %v854
    %v1093 = vpack.c.b16 %v859, %v857
    %v1094 = vpack.c.b16 %v860, %v858
    %v1095 = vpack.c.b16 %v863, %v861
    %v1096 = vpack.c.b16 %v864, %v862
    %v1097 = vpack.c.b16 %v867, %v865
    %v1098 = vpack.c.b16 %v868, %v866
    %v1099 = vpack.c.b16 %v871, %v869
    %v1100 = vpack.c.b16 %v872, %v870
    %v1101 = vpack.c.b16 %v875, %v873
    %v1102 = vpack.c.b16 %v876, %v874
    %v1103 = vpack.c.b16 %v879, %v877
    %v1104 = vpack.c.b16 %v880, %v878
    %v1105 = vpack.c.b16 %v883, %v881
    %v1106 = vpack.c.b16 %v884, %v882
    %v1107 = vpack.c.b16 %v887, %v885
    %v1108 = vpack.c.b16 %v888, %v886
    %v1109 = vpack.c.b16 %v891, %v889
    %v1110 = vpack.c.b16 %v892, %v890
    %v1111 = vpack.c.b16 %v895, %v893
    %v1112 = vpack.c.b16 %v896, %v894
    %v1113 = vpack.c.b16 %v899, %v897
    %v1114 = vpack.c.b16 %v900, %v898
    %v1115 = vpack.c.b16 %v903, %v901
    %v1116 = vpack.c.b16 %v904, %v902
    %v1117 = vpack.c.b16 %v907, %v905
    %v1118 = vpack.c.b16 %v908, %v906
    %v1119 = vpack.c.b16 %v911, %v909
    %v1120 = vpack.c.b16 %v912, %v910
    %1329 = vmatprep.subr.bf16.mxu0 %v914
    %1330 = vmatpush1.bf16.msra.mxu0 %v913
    %1331 = vmatprep.subr.bf16.mxu0 %v916
    %1332 = vmatpush1.bf16.msra.mxu0 %v915
    %1333 = vmatprep.subr.bf16.mxu0 %v918
    %1334 = vmatpush1.bf16.msra.mxu0 %v917
    %1335 = vmatprep.subr.bf16.mxu0 %v920
    %1336 = vmatpush1.bf16.msra.mxu0 %v919
    %1337 = vmatprep.subr.bf16.mxu0 %v922
    %1338 = vmatpush1.bf16.msra.mxu0 %v921
    %1339 = vmatprep.subr.bf16.mxu0 %v924
    %1340 = vmatpush1.bf16.msra.mxu0 %v923
    %1341 = vmatprep.subr.bf16.mxu0 %v926
    %1342 = vmatpush1.bf16.msra.mxu0 %v925
    %1343 = vmatprep.subr.bf16.mxu0 %v928
    %1344 = vmatpush1.bf16.msra.mxu0 %v927
    %1345 = vmatprep.subr.bf16.mxu0 %v930
    %1346 = vmatpush1.bf16.msra.mxu0 %v929
    %1347 = vmatprep.subr.bf16.mxu0 %v932
    %1348 = vmatpush1.bf16.msra.mxu0 %v931
    %1349 = vmatprep.subr.bf16.mxu0 %v934
    %1350 = vmatpush1.bf16.msra.mxu0 %v933
    %1351 = vmatprep.subr.bf16.mxu0 %v936
    %1352 = vmatpush1.bf16.msra.mxu0 %v935
    %1353 = vmatprep.subr.bf16.mxu0 %v938
    %1354 = vmatpush1.bf16.msra.mxu0 %v937
    %1355 = vmatprep.subr.bf16.mxu0 %v940
    %1356 = vmatpush1.bf16.msra.mxu0 %v939
    %1357 = vmatprep.subr.bf16.mxu0 %v942
    %1358 = vmatpush1.bf16.msra.mxu0 %v941
    %1359 = vmatprep.subr.bf16.mxu0 %v944
    %1360 = vmatpush1.bf16.msra.mxu0 %v943
    %1361 = vmatprep.mubr.bf16.mxu0 %v57
    %1362 = vmatmul.mubr.bf16.gmra.mrb[0].mxu0 %v56
    %v1363 = vpop.f32.mrb[0].mxu0
    %v1364 = vadd.f32 %v282, %v1363
    %v1365 = vpop.f32.mrb[0].mxu0
    %v1366 = vadd.f32 %v286, %v1365
    %v1367 = vpop.f32.mrb[0].mxu0
    %v1368 = vpop.f32.mrb[0].mxu0
    %1369 = vdwg.mxu0
    %1370 = vmatprep.subr.bf16.mxu0 %v946
    %1371 = vmatpush1.bf16.msra.mxu0 %v945
    %1372 = vmatprep.subr.bf16.mxu0 %v948
    %1373 = vmatpush1.bf16.msra.mxu0 %v947
    %1374 = vmatprep.subr.bf16.mxu0 %v950
    %1375 = vmatpush1.bf16.msra.mxu0 %v949
    %1376 = vmatprep.subr.bf16.mxu0 %v952
    %1377 = vmatpush1.bf16.msra.mxu0 %v951
    %1378 = vmatprep.subr.bf16.mxu0 %v954
    %1379 = vmatpush1.bf16.msra.mxu0 %v953
    %1380 = vmatprep.subr.bf16.mxu0 %v956
    %1381 = vmatpush1.bf16.msra.mxu0 %v955
    %1382 = vmatprep.subr.bf16.mxu0 %v958
    %1383 = vmatpush1.bf16.msra.mxu0 %v957
    %1384 = vmatprep.subr.bf16.mxu0 %v960
    %1385 = vmatpush1.bf16.msra.mxu0 %v959
    %1386 = vmatprep.subr.bf16.mxu0 %v962
    %1387 = vmatpush1.bf16.msra.mxu0 %v961
    %1388 = vmatprep.subr.bf16.mxu0 %v964
    %1389 = vmatpush1.bf16.msra.mxu0 %v963
    %1390 = vmatprep.subr.bf16.mxu0 %v966
    %1391 = vmatpush1.bf16.msra.mxu0 %v965
    %1392 = vmatprep.subr.bf16.mxu0 %v968
    %1393 = vmatpush1.bf16.msra.mxu0 %v967
    %1394 = vmatprep.subr.bf16.mxu0 %v970
    %1395 = vmatpush1.bf16.msra.mxu0 %v969
    %1396 = vmatprep.subr.bf16.mxu0 %v972
    %1397 = vmatpush1.bf16.msra.mxu0 %v971
    %1398 = vmatprep.subr.bf16.mxu0 %v974
    %1399 = vmatpush1.bf16.msra.mxu0 %v973
    %1400 = vmatprep.subr.bf16.mxu0 %v976
    %1401 = vmatpush1.bf16.msra.mxu0 %v975
    %1402 = vmatprep.mubr.bf16.mxu0 %v59
    %1403 = vmatmul.mubr.bf16.gmra.mrb[0].mxu0 %v58
    %v1404 = vpop.f32.mrb[0].mxu0
    %v1405 = vadd.f32 %v1364, %v1404
    %v1406 = vpop.f32.mrb[0].mxu0
    %v1407 = vadd.f32 %v1366, %v1406
    %v1408 = vpop.f32.mrb[0].mxu0
    %v1409 = vpop.f32.mrb[0].mxu0
    %1410 = vdwg.mxu0
    %1411 = vmatprep.subr.bf16.mxu0 %v978
    %1412 = vmatpush1.bf16.msra.mxu0 %v977
    %1413 = vmatprep.subr.bf16.mxu0 %v980
    %1414 = vmatpush1.bf16.msra.mxu0 %v979
    %1415 = vmatprep.subr.bf16.mxu0 %v982
    %1416 = vmatpush1.bf16.msra.mxu0 %v981
    %1417 = vmatprep.subr.bf16.mxu0 %v984
    %1418 = vmatpush1.bf16.msra.mxu0 %v983
    %1419 = vmatprep.subr.bf16.mxu0 %v986
    %1420 = vmatpush1.bf16.msra.mxu0 %v985
    %1421 = vmatprep.subr.bf16.mxu0 %v988
    %1422 = vmatpush1.bf16.msra.mxu0 %v987
    %1423 = vmatprep.subr.bf16.mxu0 %v990
    %1424 = vmatpush1.bf16.msra.mxu0 %v989
    %1425 = vmatprep.subr.bf16.mxu0 %v992
    %1426 = vmatpush1.bf16.msra.mxu0 %v991
    %1427 = vmatprep.subr.bf16.mxu0 %v994
    %1428 = vmatpush1.bf16.msra.mxu0 %v993
    %1429 = vmatprep.subr.bf16.mxu0 %v996
    %1430 = vmatpush1.bf16.msra.mxu0 %v995
    %1431 = vmatprep.subr.bf16.mxu0 %v998
    %1432 = vmatpush1.bf16.msra.mxu0 %v997
    %1433 = vmatprep.subr.bf16.mxu0 %v1000
    %1434 = vmatpush1.bf16.msra.mxu0 %v999
    %1435 = vmatprep.subr.bf16.mxu0 %v1002
    %1436 = vmatpush1.bf16.msra.mxu0 %v1001
    %1437 = vmatprep.subr.bf16.mxu0 %v1004
    %1438 = vmatpush1.bf16.msra.mxu0 %v1003
    %1439 = vmatprep.subr.bf16.mxu0 %v1006
    %1440 = vmatpush1.bf16.msra.mxu0 %v1005
    %1441 = vmatprep.subr.bf16.mxu0 %v1008
    %1442 = vmatpush1.bf16.msra.mxu0 %v1007
    %1443 = vmatprep.mubr.bf16.mxu0 %v61
    %1444 = vmatmul.mubr.bf16.gmra.mrb[0].mxu0 %v60
    %v1445 = vpop.f32.mrb[0].mxu0
    %v1446 = vadd.f32 %v1405, %v1445
    %v1447 = vpop.f32.mrb[0].mxu0
    %v1448 = vadd.f32 %v1407, %v1447
    %v1449 = vpop.f32.mrb[0].mxu0
    %v1450 = vpop.f32.mrb[0].mxu0
    %1451 = vdwg.mxu0
    %1452 = vmatprep.subr.bf16.mxu0 %v1010
    %1453 = vmatpush1.bf16.msra.mxu0 %v1009
    %1454 = vmatprep.subr.bf16.mxu0 %v1012
    %1455 = vmatpush1.bf16.msra.mxu0 %v1011
    %1456 = vmatprep.subr.bf16.mxu0 %v1014
    %1457 = vmatpush1.bf16.msra.mxu0 %v1013
    %1458 = vmatprep.subr.bf16.mxu0 %v1016
    %1459 = vmatpush1.bf16.msra.mxu0 %v1015
    %1460 = vmatprep.subr.bf16.mxu0 %v1018
    %1461 = vmatpush1.bf16.msra.mxu0 %v1017
    %1462 = vmatprep.subr.bf16.mxu0 %v1020
    %1463 = vmatpush1.bf16.msra.mxu0 %v1019
    %1464 = vmatprep.subr.bf16.mxu0 %v1022
    %1465 = vmatpush1.bf16.msra.mxu0 %v1021
    %1466 = vmatprep.subr.bf16.mxu0 %v1024
    %1467 = vmatpush1.bf16.msra.mxu0 %v1023
    %1468 = vmatprep.subr.bf16.mxu0 %v1026
    %1469 = vmatpush1.bf16.msra.mxu0 %v1025
    %1470 = vmatprep.subr.bf16.mxu0 %v1028
    %1471 = vmatpush1.bf16.msra.mxu0 %v1027
    %1472 = vmatprep.subr.bf16.mxu0 %v1030
    %1473 = vmatpush1.bf16.msra.mxu0 %v1029
    %1474 = vmatprep.subr.bf16.mxu0 %v1032
    %1475 = vmatpush1.bf16.msra.mxu0 %v1031
    %1476 = vmatprep.subr.bf16.mxu0 %v1034
    %1477 = vmatpush1.bf16.msra.mxu0 %v1033
    %1478 = vmatprep.subr.bf16.mxu0 %v1036
    %1479 = vmatpush1.bf16.msra.mxu0 %v1035
    %1480 = vmatprep.subr.bf16.mxu0 %v1038
    %1481 = vmatpush1.bf16.msra.mxu0 %v1037
    %1482 = vmatprep.subr.bf16.mxu0 %v1040
    %1483 = vmatpush1.bf16.msra.mxu0 %v1039
    %1484 = vmatprep.mubr.bf16.mxu0 %v63
    %1485 = vmatmul.mubr.bf16.gmra.mrb[0].mxu0 %v62
    %v1486 = vpop.f32.mrb[0].mxu0
    %v1487 = vadd.f32 %v1446, %v1486
    %v1488 = vpop.f32.mrb[0].mxu0
    %v1489 = vadd.f32 %v1448, %v1488
    %v1490 = vpop.f32.mrb[0].mxu0
    %v1491 = vpop.f32.mrb[0].mxu0
    %1492 = vdwg.mxu0
    %1493 = vmatprep.subr.bf16.mxu0 %v1042
    %1494 = vmatpush1.bf16.msra.mxu0 %v1041
    %1495 = vmatprep.subr.bf16.mxu0 %v1044
    %1496 = vmatpush1.bf16.msra.mxu0 %v1043
    %1497 = vmatprep.subr.bf16.mxu0 %v1046
    %1498 = vmatpush1.bf16.msra.mxu0 %v1045
    %1499 = vmatprep.subr.bf16.mxu0 %v1048
    %1500 = vmatpush1.bf16.msra.mxu0 %v1047
    %1501 = vmatprep.subr.bf16.mxu0 %v1050
    %1502 = vmatpush1.bf16.msra.mxu0 %v1049
    %1503 = vmatprep.subr.bf16.mxu0 %v1052
    %1504 = vmatpush1.bf16.msra.mxu0 %v1051
    %1505 = vmatprep.subr.bf16.mxu0 %v1054
    %1506 = vmatpush1.bf16.msra.mxu0 %v1053
    %1507 = vmatprep.subr.bf16.mxu0 %v1056
    %1508 = vmatpush1.bf16.msra.mxu0 %v1055
    %1509 = vmatprep.subr.bf16.mxu0 %v1058
    %1510 = vmatpush1.bf16.msra.mxu0 %v1057
    %1511 = vmatprep.subr.bf16.mxu0 %v1060
    %1512 = vmatpush1.bf16.msra.mxu0 %v1059
    %1513 = vmatprep.subr.bf16.mxu0 %v1062
    %1514 = vmatpush1.bf16.msra.mxu0 %v1061
    %1515 = vmatprep.subr.bf16.mxu0 %v1064
    %1516 = vmatpush1.bf16.msra.mxu0 %v1063
    %1517 = vmatprep.subr.bf16.mxu0 %v1066
    %1518 = vmatpush1.bf16.msra.mxu0 %v1065
    %1519 = vmatprep.subr.bf16.mxu0 %v1068
    %1520 = vmatpush1.bf16.msra.mxu0 %v1067
    %1521 = vmatprep.subr.bf16.mxu0 %v1070
    %1522 = vmatpush1.bf16.msra.mxu0 %v1069
    %1523 = vmatprep.subr.bf16.mxu0 %v1072
    %1524 = vmatpush1.bf16.msra.mxu0 %v1071
    %1525 = vmatprep.mubr.bf16.mxu0 %v65
    %1526 = vmatmul.mubr.bf16.gmra.mrb[0].mxu0 %v64
    %v1527 = vpop.f32.mrb[0].mxu0
    %v1528 = vadd.f32 %v1487, %v1527
    %v1529 = vpop.f32.mrb[0].mxu0
    %v1530 = vadd.f32 %v1489, %v1529
    %v1531 = vpop.f32.mrb[0].mxu0
    %v1532 = vpop.f32.mrb[0].mxu0
    %1533 = vdwg.mxu0
    %1534 = vmatprep.subr.bf16.mxu0 %v1074
    %1535 = vmatpush1.bf16.msra.mxu0 %v1073
    %1536 = vmatprep.subr.bf16.mxu0 %v1076
    %1537 = vmatpush1.bf16.msra.mxu0 %v1075
    %1538 = vmatprep.subr.bf16.mxu0 %v1078
    %1539 = vmatpush1.bf16.msra.mxu0 %v1077
    %1540 = vmatprep.subr.bf16.mxu0 %v1080
    %1541 = vmatpush1.bf16.msra.mxu0 %v1079
    %1542 = vmatprep.subr.bf16.mxu0 %v1082
    %1543 = vmatpush1.bf16.msra.mxu0 %v1081
    %1544 = vmatprep.subr.bf16.mxu0 %v1084
    %1545 = vmatpush1.bf16.msra.mxu0 %v1083
    %1546 = vmatprep.subr.bf16.mxu0 %v1086
    %1547 = vmatpush1.bf16.msra.mxu0 %v1085
    %1548 = vmatprep.subr.bf16.mxu0 %v1088
    %1549 = vmatpush1.bf16.msra.mxu0 %v1087
    %1550 = vmatprep.subr.bf16.mxu0 %v1090
    %1551 = vmatpush1.bf16.msra.mxu0 %v1089
    %1552 = vmatprep.subr.bf16.mxu0 %v1092
    %1553 = vmatpush1.bf16.msra.mxu0 %v1091
    %1554 = vmatprep.subr.bf16.mxu0 %v1094
    %1555 = vmatpush1.bf16.msra.mxu0 %v1093
    %1556 = vmatprep.subr.bf16.mxu0 %v1096
    %1557 = vmatpush1.bf16.msra.mxu0 %v1095
    %1558 = vmatprep.subr.bf16.mxu0 %v1098
    %1559 = vmatpush1.bf16.msra.mxu0 %v1097
    %1560 = vmatprep.subr.bf16.mxu0 %v1100
    %1561 = vmatpush1.bf16.msra.mxu0 %v1099
    %1562 = vmatprep.subr.bf16.mxu0 %v1102
    %1563 = vmatpush1.bf16.msra.mxu0 %v1101
    %1564 = vmatprep.subr.bf16.mxu0 %v1104
    %1565 = vmatpush1.bf16.msra.mxu0 %v1103
    %1566 = vmatprep.mubr.bf16.mxu0 %v67
    %1567 = vmatmul.mubr.bf16.gmra.mrb[0].mxu0 %v66
    %v1568 = vpop.f32.mrb[0].mxu0
    %v1569 = vadd.f32 %v1528, %v1568
    %v1570 = vpop.f32.mrb[0].mxu0
    %v1571 = vadd.f32 %v1530, %v1570
    %v1572 = vpop.f32.mrb[0].mxu0
    %v1573 = vpop.f32.mrb[0].mxu0
    %1574 = vdwg.mxu0
    %1575 = vmatprep.subr.bf16.mxu0 %v1106
    %1576 = vmatpush1.bf16.msra.mxu0 %v1105
    %1577 = vmatprep.subr.bf16.mxu0 %v1108
    %1578 = vmatpush1.bf16.msra.mxu0 %v1107
    %1579 = vmatprep.subr.bf16.mxu0 %v1110
    %1580 = vmatpush1.bf16.msra.mxu0 %v1109
    %1581 = vmatprep.subr.bf16.mxu0 %v1112
    %1582 = vmatpush1.bf16.msra.mxu0 %v1111
    %1583 = vmatprep.subr.bf16.mxu0 %v1114
    %1584 = vmatpush1.bf16.msra.mxu0 %v1113
    %1585 = vmatprep.subr.bf16.mxu0 %v1116
    %1586 = vmatpush1.bf16.msra.mxu0 %v1115
    %1587 = vmatprep.subr.bf16.mxu0 %v1118
    %1588 = vmatpush1.bf16.msra.mxu0 %v1117
    %1589 = vmatprep.subr.bf16.mxu0 %v1120
    %1590 = vmatpush1.bf16.msra.mxu0 %v1119
    %1591 = vmatprep.subr.bf16.mxu0 0
    %1592 = vmatpush1.bf16.msra.mxu0 0
    %1593 = vmatprep.subr.bf16.mxu0 0
    %1594 = vmatpush1.bf16.msra.mxu0 0
    %1595 = vmatprep.subr.bf16.mxu0 0
    %1596 = vmatpush1.bf16.msra.mxu0 0
    %1597 = vmatprep.subr.bf16.mxu0 0
    %1598 = vmatpush1.bf16.msra.mxu0 0
    %1599 = vmatprep.subr.bf16.mxu0 0
    %1600 = vmatpush1.bf16.msra.mxu0 0
    %1601 = vmatprep.subr.bf16.mxu0 0
    %1602 = vmatpush1.bf16.msra.mxu0 0
    %1603 = vmatprep.subr.bf16.mxu0 0
    %1604 = vmatpush1.bf16.msra.mxu0 0
    %1605 = vmatprep.subr.bf16.mxu0 0
    %1606 = vmatpush1.bf16.msra.mxu0 0
    %1607 = vmatprep.mubr.bf16.mxu0 0
    %1608 = vmatmul.mubr.bf16.gmra.mrb[0].mxu0 %v68
    %v1609 = vpop.f32.mrb[0].mxu0
    %v1610 = vadd.f32 %v1569, %v1609
    %v1611 = vpop.f32.mrb[0].mxu0
    %v1612 = vadd.f32 %v1571, %v1611
    %v1613 = vpop.f32.mrb[0].mxu0
    %v1614 = vpop.f32.mrb[0].mxu0
    %1615 = vdwg.mxu0
    %v1616 = vmax.f32 %v1610, 0.0
    %v1617 = vmax.f32 %v1612, 0.0
    %v1618 = vpack.c.bf16 %v1616, %v1616
    %v1619 = vpack.c.bf16 %v1617, %v1617
    %v1620 = vld [vmem:[%s3] sm:$0xf]
    %v1621 = vld [vmem:[%s3 + $0x4] sm:$0xf]
    %v1622 = vld [vmem:[%s3 + $0x8] sm:$0xf]
    %v1623 = vld [vmem:[%s3 + $0xc] sm:$0xf]
    %v1624 = vld [vmem:[%s3 + $0x10] sm:$0xf]
    %v1625 = vld [vmem:[%s3 + $0x14] sm:$0xf]
    %v1626 = vld [vmem:[%s3 + $0x18] sm:$0xf]
    %v1627 = vld [vmem:[%s3 + $0x1c] sm:$0xf]
    %v1628 = vld [vmem:[%s3 + $0x20] sm:$0xf]
    %v1629 = vld [vmem:[%s3 + $0x24] sm:$0xf]
    %v1630 = vld [vmem:[%s3 + $0x28] sm:$0xf]
    %v1631 = vld [vmem:[%s3 + $0x2c] sm:$0xf]
    %v1632 = vld [vmem:[%s3 + $0x30] sm:$0xf]
    %v1633 = vld [vmem:[%s3 + $0x34] sm:$0xf]
    %v1634 = vld [vmem:[%s3 + $0x38] sm:$0xf]
    %v1635 = vld [vmem:[%s3 + $0x3c] sm:$0xf]
    %v1636 = vld [vmem:[%s3 + $0x40] sm:$0xf]
    %v1637 = vld [vmem:[%s3 + $0x44] sm:$0xf]
    %v1638 = vld [vmem:[%s3 + $0x48] sm:$0xf]
    %v1639 = vld [vmem:[%s3 + $0x4c] sm:$0xf]
    %v1640 = vld [vmem:[%s3 + $0x50] sm:$0xf]
    %v1641 = vld [vmem:[%s3 + $0x54] sm:$0xf]
    %v1642 = vld [vmem:[%s3 + $0x58] sm:$0xf]
    %v1643 = vld [vmem:[%s3 + $0x5c] sm:$0xf]
    %v1644 = vld [vmem:[%s3 + $0x60] sm:$0xf]
    %v1645 = vld [vmem:[%s3 + $0x64] sm:$0xf]
    %v1646 = vld [vmem:[%s3 + $0x68] sm:$0xf]
    %v1647 = vld [vmem:[%s3 + $0x6c] sm:$0xf]
    %v1648 = vld [vmem:[%s3 + $0x70] sm:$0xf]
    %v1649 = vld [vmem:[%s3 + $0x74] sm:$0xf]
    %v1650 = vld [vmem:[%s3 + $0x78] sm:$0xf]
    %v1651 = vld [vmem:[%s3 + $0x7c] sm:$0xf]
    %v1652 = vld [vmem:[%s4] sm:$0x1]
    %v1654 = vlaneseq
    %v1655 = vshrl.u32 %v1654, 7
    %v1656 = vsub.s32 0, %v1655
    %v1657 = vrot.slane %v1652, %v1656
    %v1691 = vunpack.c.l.b16 %v1620
    %v1692 = vunpack.c.l.b16 %v1621
    %v1693 = vunpack.c.l.b16 %v1622
    %v1694 = vunpack.c.l.b16 %v1623
    %v1695 = vunpack.c.l.b16 %v1624
    %v1696 = vunpack.c.l.b16 %v1625
    %v1697 = vunpack.c.l.b16 %v1626
    %v1698 = vunpack.c.l.b16 %v1627
    %v1699 = vunpack.c.l.b16 %v1628
    %v1700 = vunpack.c.l.b16 %v1629
    %v1701 = vunpack.c.l.b16 %v1630
    %v1702 = vunpack.c.l.b16 %v1631
    %v1703 = vunpack.c.l.b16 %v1632
    %v1704 = vunpack.c.l.b16 %v1633
    %v1705 = vunpack.c.l.b16 %v1634
    %v1706 = vunpack.c.l.b16 %v1635
    %v1707 = vunpack.c.l.b16 %v1636
    %v1708 = vunpack.c.l.b16 %v1637
    %v1709 = vunpack.c.l.b16 %v1638
    %v1710 = vunpack.c.l.b16 %v1639
    %v1711 = vunpack.c.l.b16 %v1640
    %v1712 = vunpack.c.l.b16 %v1641
    %v1713 = vunpack.c.l.b16 %v1642
    %v1714 = vunpack.c.l.b16 %v1643
    %v1715 = vunpack.c.l.b16 %v1644
    %v1716 = vunpack.c.l.b16 %v1645
    %v1717 = vunpack.c.l.b16 %v1646
    %v1718 = vunpack.c.l.b16 %v1647
    %v1719 = vunpack.c.l.b16 %v1648
    %v1720 = vunpack.c.l.b16 %v1649
    %v1721 = vunpack.c.l.b16 %v1650
    %v1722 = vunpack.c.l.b16 %v1651
    %v1723 = vpack.c.b16 %v1692, %v1691
    %v1724 = vpack.c.b16 %v1694, %v1693
    %v1725 = vpack.c.b16 %v1696, %v1695
    %v1726 = vpack.c.b16 %v1698, %v1697
    %v1727 = vpack.c.b16 %v1700, %v1699
    %v1728 = vpack.c.b16 %v1702, %v1701
    %v1729 = vpack.c.b16 %v1704, %v1703
    %v1730 = vpack.c.b16 %v1706, %v1705
    %v1731 = vpack.c.b16 %v1708, %v1707
    %v1732 = vpack.c.b16 %v1710, %v1709
    %v1733 = vpack.c.b16 %v1712, %v1711
    %v1734 = vpack.c.b16 %v1714, %v1713
    %v1735 = vpack.c.b16 %v1716, %v1715
    %v1736 = vpack.c.b16 %v1718, %v1717
    %v1737 = vpack.c.b16 %v1720, %v1719
    %v1738 = vpack.c.b16 %v1722, %v1721
    %1755 = vmatprep.subr.bf16.mxu0 0
    %1756 = vmatpush1.bf16.msra.mxu0 %v1723
    %1757 = vmatprep.subr.bf16.mxu0 0
    %1758 = vmatpush1.bf16.msra.mxu0 %v1724
    %1759 = vmatprep.subr.bf16.mxu0 0
    %1760 = vmatpush1.bf16.msra.mxu0 %v1725
    %1761 = vmatprep.subr.bf16.mxu0 0
    %1762 = vmatpush1.bf16.msra.mxu0 %v1726
    %1763 = vmatprep.subr.bf16.mxu0 0
    %1764 = vmatpush1.bf16.msra.mxu0 %v1727
    %1765 = vmatprep.subr.bf16.mxu0 0
    %1766 = vmatpush1.bf16.msra.mxu0 %v1728
    %1767 = vmatprep.subr.bf16.mxu0 0
    %1768 = vmatpush1.bf16.msra.mxu0 %v1729
    %1769 = vmatprep.subr.bf16.mxu0 0
    %1770 = vmatpush1.bf16.msra.mxu0 %v1730
    %1771 = vmatprep.subr.bf16.mxu0 0
    %1772 = vmatpush1.bf16.msra.mxu0 %v1731
    %1773 = vmatprep.subr.bf16.mxu0 0
    %1774 = vmatpush1.bf16.msra.mxu0 %v1732
    %1775 = vmatprep.subr.bf16.mxu0 0
    %1776 = vmatpush1.bf16.msra.mxu0 %v1733
    %1777 = vmatprep.subr.bf16.mxu0 0
    %1778 = vmatpush1.bf16.msra.mxu0 %v1734
    %1779 = vmatprep.subr.bf16.mxu0 0
    %1780 = vmatpush1.bf16.msra.mxu0 %v1735
    %1781 = vmatprep.subr.bf16.mxu0 0
    %1782 = vmatpush1.bf16.msra.mxu0 %v1736
    %1783 = vmatprep.subr.bf16.mxu0 0
    %1784 = vmatpush1.bf16.msra.mxu0 %v1737
    %1785 = vmatprep.subr.bf16.mxu0 0
    %1786 = vmatpush1.bf16.msra.mxu0 %v1738
    %1787 = vmatprep.mubr.bf16.mxu0 %v1619
    %1788 = vmatmul.mubr.bf16.gmra.mrb[0].mxu0 %v1618
    %v1789 = vpop.f32.mrb[0].mxu0
    %v1790 = vadd.f32 %v1657, %v1789
    %v1791 = vpop.f32.mrb[0].mxu0
    %v1792 = vpop.f32.mrb[0].mxu0
    %v1793 = vpop.f32.mrb[0].mxu0
    %1794 = vdwg.mxu0
    %v1795 = vmax.f32 %v1790, 0.0
    %v1796 = vld [vmem:[%s5] sm:$0x1]
    %v1798 = vlaneseq
    %v1799 = vshrl.u32 %v1798, 7
    %v1800 = vsub.s32 0, %v1799
    %v1801 = vrot.slane %v1796, %v1800
    %v1803 = vmul.f32 %v1795, %v1801
    %1804 = vadd.xlane.f32.xlu0 %v1803
    %v1805 = vpop.xlane.xlu0 %1804
    %v1806 = vld [vmem:[#allocation2] sm:$0x1]
    %v1808 = vlaneseq
    %v1809 = vshrl.u32 %v1808, 7
    %v1810 = vsub.s32 0, %v1809
    %v1811 = vrot.slane %v1806, %v1810
    %v1813 = vadd.f32 %v1805, %v1811
    %vm1814 = vcmask 7168
    %1815 = vst.msk [vmem:[%s7] sm:$0xff] %vm1814, %v1813
    // Predicated region
    $region34: #{my_classifier_forward.1} parent=1 // pred_check
      _
    $region35: #{my_classifier_forward.1} parent=1 // pred_check_branch
      %1817 = sbr.rel (0) target = $region37
    $region36: #{my_classifier_forward.1} parent=1 // pred_region
      _
    $region37: #{my_classifier_forward.1} parent=1 // pred_fallthru
      _
    // Predicated region
    $region38: #{my_classifier_forward.1} parent=1 // pred_check
      _
    $region39: #{my_classifier_forward.1} parent=1 // pred_check_branch
      %1819 = sbr.rel (0) target = $region41
    $region40: #{my_classifier_forward.1} parent=1 // pred_region
      _
    $region41: #{my_classifier_forward.1} parent=1 // pred_fallthru
      _
    %1820 = vsyncpa [#allocation4], 1

</llo_original>
